<compile_context>
chip_gen: v7x
topology: tpu7x:2x2x1
jax: 0.10.0
libtpu: 0.0.40
codegen_flags: <defaults>
</compile_context>

<pallas_src>
import functools
import math

import jax
import jax.numpy as jnp
from jax.experimental import pallas as pl
from jax.experimental.pallas import tpu as pltpu


def _layer_norm(v, gamma, beta, eps=1e-5):
    mu = jnp.mean(v, axis=-1, keepdims=True)
    var = jnp.mean((v - mu) ** 2, axis=-1, keepdims=True)
    return (v - mu) * jax.lax.rsqrt(var + eps) * gamma + beta


def _gelu(x):
    # TODO(synk): nn.GELU() default is the exact erf-based GELU; erf may not lower in
    # Mosaic, so the tanh approximation is used here (max abs error ~1e-3).
    c = math.sqrt(2.0 / math.pi)
    return 0.5 * x * (1.0 + jnp.tanh(c * (x + 0.044715 * x * x * x)))


def _encoder_kernel(x_ref,
                    g1_ref, b1_ref,
                    wq_ref, bq_ref, wk_ref, bk_ref, wv_ref, bv_ref,
                    wo_ref, bo_ref,
                    g2_ref, b2_ref,
                    w1_ref, bm1_ref, w2_ref, bm2_ref,
                    o_ref,
                    k_scr, v_scr,
                    *, num_heads, seq_len, seq_tile):
    H = num_heads
    tS = seq_tile
    S_pad = x_ref.shape[0]        # padded full sequence length (K/V)
    E = x_ref.shape[1]
    d = E // H
    s_idx = pl.program_id(1)
    bf16, f32 = jnp.bfloat16, jnp.float32

    # ------- K/V projection: once per batch element, cached in VMEM scratch -------
    @pl.when(s_idx == 0)
    def _():
        x_full = x_ref[...]                                              # (S_pad, E) f32
        ln_kv = _layer_norm(x_full, g1_ref[...], b1_ref[...])
        ln_kv_b = ln_kv.astype(bf16)
        k = jnp.dot(ln_kv_b, wk_ref[...], preferred_element_type=f32) + bk_ref[...]
        v = jnp.dot(ln_kv_b, wv_ref[...], preferred_element_type=f32) + bv_ref[...]
        k_scr[...] = jnp.transpose(k.reshape(S_pad, H, d), (1, 0, 2)).astype(bf16)
        v_scr[...] = jnp.transpose(v.reshape(S_pad, H, d), (1, 0, 2)).astype(bf16)

    # ------- Query / residual tile (sliced from the resident full-seq block) -------
    q_start = pl.multiple_of(s_idx * tS, tS)
    xq = x_ref[pl.ds(q_start, tS), :]                                    # (tS, E) f32

    ln_q = _layer_norm(xq, g1_ref[...], b1_ref[...])
    # 1/sqrt(d) is folded into wq/bq by the wrapper.
    q = jnp.dot(ln_q.astype(bf16), wq_ref[...],
                preferred_element_type=f32) + bq_ref[...]                # (tS, E)
    qh = jnp.transpose(q.reshape(tS, H, d), (1, 0, 2)).astype(bf16)      # (H, tS, d)

    scores = jnp.einsum('hqd,hkd->hqk', qh, k_scr[...],
                        preferred_element_type=f32)                      # (H, tS, S_pad)
    if seq_len != S_pad:  # mask padded key columns
        col = jax.lax.broadcasted_iota(jnp.int32, (1, 1, S_pad), 2)
        scores = scores + jnp.where(col < seq_len, 0.0, -1e30).astype(f32)

    scores = scores - jnp.max(scores, axis=-1, keepdims=True)
    p = jnp.exp(scores)
    p = p * pl.reciprocal(jnp.sum(p, axis=-1, keepdims=True), approx=True)

    ctx = jnp.einsum('hqk,hkd->hqd', p.astype(bf16), v_scr[...],
                     preferred_element_type=f32)                         # (H, tS, d)
    ctx2d = jnp.transpose(ctx, (1, 0, 2)).reshape(tS, E)                 # (tS, E)
    attn = jnp.dot(ctx2d.astype(bf16), wo_ref[...],
                   preferred_element_type=f32) + bo_ref[...]             # (tS, E)
    x1 = attn + xq                                                       # residual

    # ---------------------------------- MLP ----------------------------------
    ln2 = _layer_norm(x1, g2_ref[...], b2_ref[...])
    h1 = jnp.dot(ln2.astype(bf16), w1_ref[...],
                 preferred_element_type=f32) + bm1_ref[...]              # (tS, M)
    h1 = _gelu(h1)
    mlp = jnp.dot(h1.astype(bf16), w2_ref[...],
                  preferred_element_type=f32) + bm2_ref[...]             # (tS, E)

    o_ref[...] = (mlp + x1).astype(o_ref.dtype)                          # residual


def _round_up(a, m):
    return (a + m - 1) // m * m


def transformer_encoder_block(x, params, *, num_heads, seq_tile=None):
    B, S, E = x.shape
    H = num_heads
    assert E % H == 0
    d = E // H
    M = params["w_mlp1"].shape[0]
    scale = 1.0 / math.sqrt(d)

    # Generation-aware VMEM capacity (v5e/v6e: 128 MiB, v7x: 64 MiB per TC).
    try:
        info = pltpu.get_tpu_info()
        vmem_cap = int(getattr(info, "vmem_capacity_bytes", 64 * 1024 * 1024))
    except Exception:
        vmem_cap = 64 * 1024 * 1024

    # Pad the sequence so the K/V axis and score lane dim are tile friendly.
    S_pad = _round_up(S, 8) if S <= 128 else _round_up(S, 128)

    if seq_tile is None:
        if S_pad <= 128:
            seq_tile = S_pad
        elif vmem_cap >= 100 * 1024 * 1024 and S_pad % 256 == 0:
            seq_tile = 256          # v5e/v6e: 128 MiB VMEM -> larger query tile
        else:
            seq_tile = 128          # v7x: 64 MiB VMEM
    tS = seq_tile
    assert S_pad % tS == 0
    n_s_tiles = S_pad // tS

    x_p = x if S_pad == S else jnp.pad(x, ((0, 0), (0, S_pad - S), (0, 0)))

    # ---- wrapper-side layout plumbing (weights are constants; this is free) ----
    f32, bf16 = jnp.float32, jnp.bfloat16
    wqkv = params["w_qkv"]                        # (3E, E)  packed in_proj_weight
    bqkv = params["b_qkv"].reshape(3 * E)
    wq, wk, wv = wqkv[:E], wqkv[E:2 * E], wqkv[2 * E:]
    bq, bk, bv = bqkv[:E], bqkv[E:2 * E], bqkv[2 * E:]

    weights = [
        params["ln1_g"].reshape(1, E).astype(f32),
        params["ln1_b"].reshape(1, E).astype(f32),
        (wq.T * scale).astype(bf16),              # (E,E) input-major, 1/sqrt(d) folded
        (bq.reshape(1, E) * scale).astype(f32),
        wk.T.astype(bf16),                        # (E,E) input-major
        bk.reshape(1, E).astype(f32),
        wv.T.astype(bf16),                        # (E,E) input-major
        bv.reshape(1, E).astype(f32),
        params["w_out"].T.astype(bf16),           # (E,E) input-major
        params["b_out"].reshape(1, E).astype(f32),
        params["ln2_g"].reshape(1, E).astype(f32),
        params["ln2_b"].reshape(1, E).astype(f32),
        params["w_mlp1"].T.astype(bf16),          # (E, M) input-major
        params["b_mlp1"].reshape(1, M).astype(f32),
        params["w_mlp2"].T.astype(bf16),          # (M, E) input-major
        params["b_mlp2"].reshape(1, E).astype(f32),
    ]

    def const_spec(arr):                          # constant-index, single-buffered
        nd = arr.ndim
        return pl.BlockSpec(arr.shape, lambda b, s, _nd=nd: (0,) * _nd,
                            pipeline_mode=pl.Buffered(1))

    kernel = functools.partial(_encoder_kernel, num_heads=H, seq_len=S, seq_tile=tS)

    # ---- VMEM budget + cost estimate (x DMA'd once per batch element) ----
    weight_bytes = sum(int(w.size) * w.dtype.itemsize for w in weights)
    scratch_bytes = 2 * H * S_pad * d * 2                       # bf16 K/V cache
    act_bytes = 2 * S_pad * E * 4 + 2 * tS * E * 4              # x block + out tile (dbl-buf)
    interm_bytes = 2 * (H * tS * S_pad * 4) + 2 * (tS * M * 4)  # scores / MLP hidden slack
    vmem_limit = max(32 * 1024 * 1024,
                     weight_bytes + scratch_bytes + act_bytes + interm_bytes
                     + 16 * 1024 * 1024)
    vmem_limit = int(min(vmem_limit, vmem_cap - 8 * 1024 * 1024))

    flops = int(B * (8 * S_pad * E * E + 4 * S_pad * S_pad * E + 4 * S_pad * E * M))
    transc = int(B * (H * S_pad * S_pad + S_pad * M))
    bytes_accessed = int(2 * B * S_pad * E * 4 + weight_bytes)

    out = pl.pallas_call(
        kernel,
        out_shape=jax.ShapeDtypeStruct((B, S_pad, E), x.dtype),
        grid_spec=pltpu.PrefetchScalarGridSpec(
            num_scalar_prefetch=0,
            grid=(B, n_s_tiles),
            in_specs=[pl.BlockSpec((pl.Squeezed(), S_pad, E), lambda b, s: (b, 0, 0))]
                     + [const_spec(w) for w in weights],
            out_specs=pl.BlockSpec((pl.Squeezed(), tS, E), lambda b, s: (b, s, 0)),
            scratch_shapes=[pltpu.VMEM((H, S_pad, d), jnp.bfloat16),   # K cache
                            pltpu.VMEM((H, S_pad, d), jnp.bfloat16)],  # V cache
        ),
        compiler_params=pltpu.CompilerParams(
            dimension_semantics=("parallel", "arbitrary"),
            vmem_limit_bytes=vmem_limit,
        ),
        cost_estimate=pl.CostEstimate(
            flops=flops, transcendentals=transc, bytes_accessed=bytes_accessed),
    )(x_p, *weights)

    return out[:, :S, :] if S_pad != S else out


def init_params(key, embed_dim, mlp_size):
    # PyTorch-native parameter layouts (nn.MultiheadAttention / nn.Linear / nn.LayerNorm).
    E, M = embed_dim, mlp_size
    ks = jax.random.split(key, 6)
    s = 0.02
    return {
        "ln1_g": jnp.ones((E,), jnp.float32),
        "ln1_b": jnp.zeros((E,), jnp.float32),
        "w_qkv": s * jax.random.normal(ks[0], (3 * E, E), jnp.float32),
        "b_qkv": jnp.zeros((3 * E,), jnp.float32),
        "w_out": s * jax.random.normal(ks[1], (E, E), jnp.float32),
        "b_out": jnp.zeros((E,), jnp.float32),
        "ln2_g": jnp.ones((E,), jnp.float32),
        "ln2_b": jnp.zeros((E,), jnp.float32),
        "w_mlp1": s * jax.random.normal(ks[2], (M, E), jnp.float32),
        "b_mlp1": s * jax.random.normal(ks[3], (M,), jnp.float32),
        "w_mlp2": s * jax.random.normal(ks[4], (E, M), jnp.float32),
        "b_mlp2": s * jax.random.normal(ks[5], (E,), jnp.float32),
    }


if __name__ == "__main__":
    # Small shapes consistent with the module: (batch, seq, embedding_dim)
    B, S, E = 2, 8, 32
    NUM_HEADS = 4
    MLP_SIZE = 64

    key = jax.random.PRNGKey(0)
    kx, kp = jax.random.split(key)
    x = jax.random.normal(kx, (B, S, E), jnp.float32)
    params = init_params(kp, E, MLP_SIZE)

    out = transformer_encoder_block(x, params, num_heads=NUM_HEADS)
    jax.block_until_ready(out)
    assert out.shape == (B, S, E) and out.dtype == jnp.float32
    assert bool(jnp.all(jnp.isfinite(out)))
    print("KERNEL_OK")
</pallas_src>

<mosaic_0001>
module attributes {stable_mosaic.version = 11 : i64} {
  func.func @_encoder_kernel(%arg0: i32, %arg1: i32, %arg2: memref<1x8x32xf32, #tpu.memory_space<vmem>>, %arg3: memref<1x32xf32, #tpu.memory_space<vmem>>, %arg4: memref<1x32xf32, #tpu.memory_space<vmem>>, %arg5: memref<32x32xbf16, #tpu.memory_space<vmem>>, %arg6: memref<1x32xf32, #tpu.memory_space<vmem>>, %arg7: memref<32x32xbf16, #tpu.memory_space<vmem>>, %arg8: memref<1x32xf32, #tpu.memory_space<vmem>>, %arg9: memref<32x32xbf16, #tpu.memory_space<vmem>>, %arg10: memref<1x32xf32, #tpu.memory_space<vmem>>, %arg11: memref<32x32xbf16, #tpu.memory_space<vmem>>, %arg12: memref<1x32xf32, #tpu.memory_space<vmem>>, %arg13: memref<1x32xf32, #tpu.memory_space<vmem>>, %arg14: memref<1x32xf32, #tpu.memory_space<vmem>>, %arg15: memref<32x64xbf16, #tpu.memory_space<vmem>>, %arg16: memref<1x64xf32, #tpu.memory_space<vmem>>, %arg17: memref<64x32xbf16, #tpu.memory_space<vmem>>, %arg18: memref<1x32xf32, #tpu.memory_space<vmem>>, %arg19: memref<1x8x32xf32, #tpu.memory_space<vmem>>, %arg20: memref<4x8x8xbf16, #tpu.memory_space<vmem>>, %arg21: memref<4x8x8xbf16, #tpu.memory_space<vmem>>) attributes {dimension_semantics = [#tpu.dimension_semantics<parallel>, #tpu.dimension_semantics<arbitrary>], iteration_bounds = array<i64: 2, 1>, scalar_prefetch = 0 : i64, scratch_operands = 2 : i64, tpu.core_type = #tpu.core_type<tc>, window_params = [{transform_indices = @transform_0, window_bounds = array<i64: 1, 8, 32>}, {pipeline_mode = #tpu.pipeline_mode<synchronous>, transform_indices = @transform_1, window_bounds = array<i64: 1, 32>}, {pipeline_mode = #tpu.pipeline_mode<synchronous>, transform_indices = @transform_2, window_bounds = array<i64: 1, 32>}, {pipeline_mode = #tpu.pipeline_mode<synchronous>, transform_indices = @transform_3, window_bounds = array<i64: 32, 32>}, {pipeline_mode = #tpu.pipeline_mode<synchronous>, transform_indices = @transform_4, window_bounds = array<i64: 1, 32>}, {pipeline_mode = #tpu.pipeline_mode<synchronous>, transform_indices = @transform_5, window_bounds = array<i64: 32, 32>}, {pipeline_mode = #tpu.pipeline_mode<synchronous>, transform_indices = @transform_6, window_bounds = array<i64: 1, 32>}, {pipeline_mode = #tpu.pipeline_mode<synchronous>, transform_indices = @transform_7, window_bounds = array<i64: 32, 32>}, {pipeline_mode = #tpu.pipeline_mode<synchronous>, transform_indices = @transform_8, window_bounds = array<i64: 1, 32>}, {pipeline_mode = #tpu.pipeline_mode<synchronous>, transform_indices = @transform_9, window_bounds = array<i64: 32, 32>}, {pipeline_mode = #tpu.pipeline_mode<synchronous>, transform_indices = @transform_10, window_bounds = array<i64: 1, 32>}, {pipeline_mode = #tpu.pipeline_mode<synchronous>, transform_indices = @transform_11, window_bounds = array<i64: 1, 32>}, {pipeline_mode = #tpu.pipeline_mode<synchronous>, transform_indices = @transform_12, window_bounds = array<i64: 1, 32>}, {pipeline_mode = #tpu.pipeline_mode<synchronous>, transform_indices = @transform_13, window_bounds = array<i64: 32, 64>}, {pipeline_mode = #tpu.pipeline_mode<synchronous>, transform_indices = @transform_14, window_bounds = array<i64: 1, 64>}, {pipeline_mode = #tpu.pipeline_mode<synchronous>, transform_indices = @transform_15, window_bounds = array<i64: 64, 32>}, {pipeline_mode = #tpu.pipeline_mode<synchronous>, transform_indices = @transform_16, window_bounds = array<i64: 1, 32>}, {transform_indices = @transform_17, window_bounds = array<i64: 1, 8, 32>}]} {
    %c0_i32 = arith.constant 0 : i32
    %0 = arith.cmpi eq, %arg1, %c0_i32 : i32
    %1 = arith.extui %0 : i1 to i32
    %c0_i32_0 = arith.constant 0 : i32
    %2 = arith.cmpi ne, %1, %c0_i32_0 : i32
    scf.if %2 {
      %c0_56 = arith.constant 0 : index
      %c0_57 = arith.constant 0 : index
      %c0_58 = arith.constant 0 : index
      %118 = vector.load %arg2[%c0_56, %c0_57, %c0_58] : memref<1x8x32xf32, #tpu.memory_space<vmem>>, vector<1x8x32xf32>
      %119 = vector.shape_cast %118 : vector<1x8x32xf32> to vector<8x32xf32>
      %c0_59 = arith.constant 0 : index
      %c0_60 = arith.constant 0 : index
      %120 = vector.load %arg3[%c0_59, %c0_60] : memref<1x32xf32, #tpu.memory_space<vmem>>, vector<1x32xf32>
      %c0_61 = arith.constant 0 : index
      %c0_62 = arith.constant 0 : index
      %121 = vector.load %arg4[%c0_61, %c0_62] : memref<1x32xf32, #tpu.memory_space<vmem>>, vector<1x32xf32>
      %cst_63 = arith.constant dense<0.000000e+00> : vector<8xf32>
      %122 = vector.multi_reduction <add>, %119, %cst_63 [1] : vector<8x32xf32> to vector<8xf32>
      %123 = vector.shape_cast %122 : vector<8xf32> to vector<8x1xf32>
      %cst_64 = arith.constant 3.200000e+01 : f32
      %124 = vector.broadcast %cst_64 : f32 to vector<8x1xf32>
      %125 = arith.divf %123, %124 : vector<8x1xf32>
      %126 = vector.broadcast %125 : vector<8x1xf32> to vector<8x32xf32>
      %127 = arith.subf %119, %126 : vector<8x32xf32>
      %128 = arith.mulf %127, %127 : vector<8x32xf32>
      %cst_65 = arith.constant dense<0.000000e+00> : vector<8xf32>
      %129 = vector.multi_reduction <add>, %128, %cst_65 [1] : vector<8x32xf32> to vector<8xf32>
      %130 = vector.shape_cast %129 : vector<8xf32> to vector<8x1xf32>
      %cst_66 = arith.constant 3.200000e+01 : f32
      %131 = vector.broadcast %cst_66 : f32 to vector<8x1xf32>
      %132 = arith.divf %130, %131 : vector<8x1xf32>
      %133 = vector.broadcast %125 : vector<8x1xf32> to vector<8x32xf32>
      %134 = arith.subf %119, %133 : vector<8x32xf32>
      %cst_67 = arith.constant 9.99999974E-6 : f32
      %135 = vector.broadcast %cst_67 : f32 to vector<8x1xf32>
      %136 = arith.addf %132, %135 : vector<8x1xf32>
      %137 = math.rsqrt %136 : vector<8x1xf32>
      %138 = vector.broadcast %137 : vector<8x1xf32> to vector<8x32xf32>
      %139 = arith.mulf %134, %138 : vector<8x32xf32>
      %140 = vector.broadcast %120 : vector<1x32xf32> to vector<8x32xf32>
      %141 = arith.mulf %139, %140 : vector<8x32xf32>
      %142 = vector.broadcast %121 : vector<1x32xf32> to vector<8x32xf32>
      %143 = arith.addf %141, %142 : vector<8x32xf32>
      %144 = arith.truncf %143 : vector<8x32xf32> to vector<8x32xbf16>
      %c0_68 = arith.constant 0 : index
      %c0_69 = arith.constant 0 : index
      %145 = vector.load %arg7[%c0_68, %c0_69] : memref<32x32xbf16, #tpu.memory_space<vmem>>, vector<32x32xbf16>
      %cst_70 = arith.constant dense<0.000000e+00> : vector<8x32xf32>
      %146 = tpu.matmul %144, %145, %cst_70 {dimension_numbers = #tpu.dot_dimension_numbers<[1], [0], [0], [1], [0, 0, 1, 1], [], []>} : vector<8x32xbf16>, vector<32x32xbf16>, vector<8x32xf32> -> vector<8x32xf32>
      %c0_71 = arith.constant 0 : index
      %c0_72 = arith.constant 0 : index
      %147 = vector.load %arg8[%c0_71, %c0_72] : memref<1x32xf32, #tpu.memory_space<vmem>>, vector<1x32xf32>
      %148 = vector.broadcast %147 : vector<1x32xf32> to vector<8x32xf32>
      %149 = arith.addf %146, %148 : vector<8x32xf32>
      %c0_73 = arith.constant 0 : index
      %c0_74 = arith.constant 0 : index
      %150 = vector.load %arg9[%c0_73, %c0_74] : memref<32x32xbf16, #tpu.memory_space<vmem>>, vector<32x32xbf16>
      %cst_75 = arith.constant dense<0.000000e+00> : vector<8x32xf32>
      %151 = tpu.matmul %144, %150, %cst_75 {dimension_numbers = #tpu.dot_dimension_numbers<[1], [0], [0], [1], [0, 0, 1, 1], [], []>} : vector<8x32xbf16>, vector<32x32xbf16>, vector<8x32xf32> -> vector<8x32xf32>
      %c0_76 = arith.constant 0 : index
      %c0_77 = arith.constant 0 : index
      %152 = vector.load %arg10[%c0_76, %c0_77] : memref<1x32xf32, #tpu.memory_space<vmem>>, vector<1x32xf32>
      %153 = vector.broadcast %152 : vector<1x32xf32> to vector<8x32xf32>
      %154 = arith.addf %151, %153 : vector<8x32xf32>
      %155 = vector.shape_cast %149 : vector<8x32xf32> to vector<8x4x8xf32>
      %156 = tpu.transpose %155, [1, 0, 2] : vector<8x4x8xf32> -> vector<4x8x8xf32>
      %157 = arith.truncf %156 : vector<4x8x8xf32> to vector<4x8x8xbf16>
      %c0_78 = arith.constant 0 : index
      %c0_79 = arith.constant 0 : index
      %c0_80 = arith.constant 0 : index
      %158 = vector.load %arg20[%c0_78, %c0_79, %c0_80] : memref<4x8x8xbf16, #tpu.memory_space<vmem>>, vector<4x8x8xbf16>
      tpu.vector_store %arg20[%c0_78, %c0_79, %c0_80], %157 {strides = array<i32>} : memref<4x8x8xbf16, #tpu.memory_space<vmem>>, vector<4x8x8xbf16>,
      %159 = vector.shape_cast %154 : vector<8x32xf32> to vector<8x4x8xf32>
      %160 = tpu.transpose %159, [1, 0, 2] : vector<8x4x8xf32> -> vector<4x8x8xf32>
      %161 = arith.truncf %160 : vector<4x8x8xf32> to vector<4x8x8xbf16>
      %c0_81 = arith.constant 0 : index
      %c0_82 = arith.constant 0 : index
      %c0_83 = arith.constant 0 : index
      %162 = vector.load %arg21[%c0_81, %c0_82, %c0_83] : memref<4x8x8xbf16, #tpu.memory_space<vmem>>, vector<4x8x8xbf16>
      tpu.vector_store %arg21[%c0_81, %c0_82, %c0_83], %161 {strides = array<i32>} : memref<4x8x8xbf16, #tpu.memory_space<vmem>>, vector<4x8x8xbf16>,
    } else {
    }
    %c8_i32 = arith.constant 8 : i32
    %3 = arith.muli %arg1, %c8_i32 : i32
    %4 = tpu.assume_multiple %3, 8 : i32
    %c0 = arith.constant 0 : index
    %5 = arith.index_cast %4 : i32 to index
    %c0_1 = arith.constant 0 : index
    %6 = vector.load %arg2[%c0, %5, %c0_1] : memref<1x8x32xf32, #tpu.memory_space<vmem>>, vector<1x8x32xf32>
    %7 = vector.shape_cast %6 : vector<1x8x32xf32> to vector<8x32xf32>
    %c0_2 = arith.constant 0 : index
    %c0_3 = arith.constant 0 : index
    %8 = vector.load %arg3[%c0_2, %c0_3] : memref<1x32xf32, #tpu.memory_space<vmem>>, vector<1x32xf32>
    %c0_4 = arith.constant 0 : index
    %c0_5 = arith.constant 0 : index
    %9 = vector.load %arg4[%c0_4, %c0_5] : memref<1x32xf32, #tpu.memory_space<vmem>>, vector<1x32xf32>
    %cst = arith.constant dense<0.000000e+00> : vector<8xf32>
    %10 = vector.multi_reduction <add>, %7, %cst [1] : vector<8x32xf32> to vector<8xf32>
    %11 = vector.shape_cast %10 : vector<8xf32> to vector<8x1xf32>
    %cst_6 = arith.constant 3.200000e+01 : f32
    %12 = vector.broadcast %cst_6 : f32 to vector<8x1xf32>
    %13 = arith.divf %11, %12 : vector<8x1xf32>
    %14 = vector.broadcast %13 : vector<8x1xf32> to vector<8x32xf32>
    %15 = arith.subf %7, %14 : vector<8x32xf32>
    %16 = arith.mulf %15, %15 : vector<8x32xf32>
    %cst_7 = arith.constant dense<0.000000e+00> : vector<8xf32>
    %17 = vector.multi_reduction <add>, %16, %cst_7 [1] : vector<8x32xf32> to vector<8xf32>
    %18 = vector.shape_cast %17 : vector<8xf32> to vector<8x1xf32>
    %cst_8 = arith.constant 3.200000e+01 : f32
    %19 = vector.broadcast %cst_8 : f32 to vector<8x1xf32>
    %20 = arith.divf %18, %19 : vector<8x1xf32>
    %21 = vector.broadcast %13 : vector<8x1xf32> to vector<8x32xf32>
    %22 = arith.subf %7, %21 : vector<8x32xf32>
    %cst_9 = arith.constant 9.99999974E-6 : f32
    %23 = vector.broadcast %cst_9 : f32 to vector<8x1xf32>
    %24 = arith.addf %20, %23 : vector<8x1xf32>
    %25 = math.rsqrt %24 : vector<8x1xf32>
    %26 = vector.broadcast %25 : vector<8x1xf32> to vector<8x32xf32>
    %27 = arith.mulf %22, %26 : vector<8x32xf32>
    %28 = vector.broadcast %8 : vector<1x32xf32> to vector<8x32xf32>
    %29 = arith.mulf %27, %28 : vector<8x32xf32>
    %30 = vector.broadcast %9 : vector<1x32xf32> to vector<8x32xf32>
    %31 = arith.addf %29, %30 : vector<8x32xf32>
    %32 = arith.truncf %31 : vector<8x32xf32> to vector<8x32xbf16>
    %c0_10 = arith.constant 0 : index
    %c0_11 = arith.constant 0 : index
    %33 = vector.load %arg5[%c0_10, %c0_11] : memref<32x32xbf16, #tpu.memory_space<vmem>>, vector<32x32xbf16>
    %cst_12 = arith.constant dense<0.000000e+00> : vector<8x32xf32>
    %34 = tpu.matmul %32, %33, %cst_12 {dimension_numbers = #tpu.dot_dimension_numbers<[1], [0], [0], [1], [0, 0, 1, 1], [], []>} : vector<8x32xbf16>, vector<32x32xbf16>, vector<8x32xf32> -> vector<8x32xf32>
    %c0_13 = arith.constant 0 : index
    %c0_14 = arith.constant 0 : index
    %35 = vector.load %arg6[%c0_13, %c0_14] : memref<1x32xf32, #tpu.memory_space<vmem>>, vector<1x32xf32>
    %36 = vector.broadcast %35 : vector<1x32xf32> to vector<8x32xf32>
    %37 = arith.addf %34, %36 : vector<8x32xf32>
    %38 = vector.shape_cast %37 : vector<8x32xf32> to vector<8x4x8xf32>
    %39 = tpu.transpose %38, [1, 0, 2] : vector<8x4x8xf32> -> vector<4x8x8xf32>
    %40 = arith.truncf %39 : vector<4x8x8xf32> to vector<4x8x8xbf16>
    %c0_15 = arith.constant 0 : index
    %c0_16 = arith.constant 0 : index
    %c0_17 = arith.constant 0 : index
    %41 = vector.load %arg20[%c0_15, %c0_16, %c0_17] : memref<4x8x8xbf16, #tpu.memory_space<vmem>>, vector<4x8x8xbf16>
    "tpu.trace_start"() <{level = 10 : i32, message = "hqd,hkd->hqk"}> : () -> ()
    %cst_18 = arith.constant dense<0.000000e+00> : vector<4x8x8xf32>
    %42 = tpu.matmul %40, %41, %cst_18 {dimension_numbers = #tpu.dot_dimension_numbers<[2], [2], [1], [1], [0, 0, 0, 1, 1, 1], [0], [0]>} : vector<4x8x8xbf16>, vector<4x8x8xbf16>, vector<4x8x8xf32> -> vector<4x8x8xf32>
    "tpu.trace_stop"() : () -> ()
    %cst_19 = arith.constant dense<0xFF800000> : vector<4x8xf32>
    %43 = vector.multi_reduction <maximumf>, %42, %cst_19 [2] : vector<4x8x8xf32> to vector<4x8xf32>
    %44 = vector.shape_cast %43 : vector<4x8xf32> to vector<4x8x1xf32>
    %45 = vector.broadcast %44 : vector<4x8x1xf32> to vector<4x8x8xf32>
    %46 = arith.subf %42, %45 : vector<4x8x8xf32>
    %47 = math.exp %46 : vector<4x8x8xf32>
    %cst_20 = arith.constant dense<0.000000e+00> : vector<4x8xf32>
    %48 = vector.multi_reduction <add>, %47, %cst_20 [2] : vector<4x8x8xf32> to vector<4x8xf32>
    %49 = vector.shape_cast %48 : vector<4x8xf32> to vector<4x8x1xf32>
    %50 = tpu.reciprocal %49 {approx = true} : vector<4x8x1xf32> -> vector<4x8x1xf32>
    %51 = vector.broadcast %50 : vector<4x8x1xf32> to vector<4x8x8xf32>
    %52 = arith.mulf %47, %51 : vector<4x8x8xf32>
    %53 = arith.truncf %52 : vector<4x8x8xf32> to vector<4x8x8xbf16>
    %c0_21 = arith.constant 0 : index
    %c0_22 = arith.constant 0 : index
    %c0_23 = arith.constant 0 : index
    %54 = vector.load %arg21[%c0_21, %c0_22, %c0_23] : memref<4x8x8xbf16, #tpu.memory_space<vmem>>, vector<4x8x8xbf16>
    "tpu.trace_start"() <{level = 10 : i32, message = "hqk,hkd->hqd"}> : () -> ()
    %cst_24 = arith.constant dense<0.000000e+00> : vector<4x8x8xf32>
    %55 = tpu.matmul %53, %54, %cst_24 {dimension_numbers = #tpu.dot_dimension_numbers<[2], [1], [1], [2], [0, 0, 0, 1, 1, 2], [0], [0]>} : vector<4x8x8xbf16>, vector<4x8x8xbf16>, vector<4x8x8xf32> -> vector<4x8x8xf32>
    "tpu.trace_stop"() : () -> ()
    %56 = tpu.transpose %55, [1, 0, 2] : vector<4x8x8xf32> -> vector<8x4x8xf32>
    %57 = vector.shape_cast %56 : vector<8x4x8xf32> to vector<8x32xf32>
    %58 = arith.truncf %57 : vector<8x32xf32> to vector<8x32xbf16>
    %c0_25 = arith.constant 0 : index
    %c0_26 = arith.constant 0 : index
    %59 = vector.load %arg11[%c0_25, %c0_26] : memref<32x32xbf16, #tpu.memory_space<vmem>>, vector<32x32xbf16>
    %cst_27 = arith.constant dense<0.000000e+00> : vector<8x32xf32>
    %60 = tpu.matmul %58, %59, %cst_27 {dimension_numbers = #tpu.dot_dimension_numbers<[1], [0], [0], [1], [0, 0, 1, 1], [], []>} : vector<8x32xbf16>, vector<32x32xbf16>, vector<8x32xf32> -> vector<8x32xf32>
    %c0_28 = arith.constant 0 : index
    %c0_29 = arith.constant 0 : index
    %61 = vector.load %arg12[%c0_28, %c0_29] : memref<1x32xf32, #tpu.memory_space<vmem>>, vector<1x32xf32>
    %62 = vector.broadcast %61 : vector<1x32xf32> to vector<8x32xf32>
    %63 = arith.addf %60, %62 : vector<8x32xf32>
    %64 = arith.addf %63, %7 : vector<8x32xf32>
    %c0_30 = arith.constant 0 : index
    %c0_31 = arith.constant 0 : index
    %65 = vector.load %arg13[%c0_30, %c0_31] : memref<1x32xf32, #tpu.memory_space<vmem>>, vector<1x32xf32>
    %c0_32 = arith.constant 0 : index
    %c0_33 = arith.constant 0 : index
    %66 = vector.load %arg14[%c0_32, %c0_33] : memref<1x32xf32, #tpu.memory_space<vmem>>, vector<1x32xf32>
    %cst_34 = arith.constant dense<0.000000e+00> : vector<8xf32>
    %67 = vector.multi_reduction <add>, %64, %cst_34 [1] : vector<8x32xf32> to vector<8xf32>
    %68 = vector.shape_cast %67 : vector<8xf32> to vector<8x1xf32>
    %cst_35 = arith.constant 3.200000e+01 : f32
    %69 = vector.broadcast %cst_35 : f32 to vector<8x1xf32>
    %70 = arith.divf %68, %69 : vector<8x1xf32>
    %71 = vector.broadcast %70 : vector<8x1xf32> to vector<8x32xf32>
    %72 = arith.subf %64, %71 : vector<8x32xf32>
    %73 = arith.mulf %72, %72 : vector<8x32xf32>
    %cst_36 = arith.constant dense<0.000000e+00> : vector<8xf32>
    %74 = vector.multi_reduction <add>, %73, %cst_36 [1] : vector<8x32xf32> to vector<8xf32>
    %75 = vector.shape_cast %74 : vector<8xf32> to vector<8x1xf32>
    %cst_37 = arith.constant 3.200000e+01 : f32
    %76 = vector.broadcast %cst_37 : f32 to vector<8x1xf32>
    %77 = arith.divf %75, %76 : vector<8x1xf32>
    %78 = vector.broadcast %70 : vector<8x1xf32> to vector<8x32xf32>
    %79 = arith.subf %64, %78 : vector<8x32xf32>
    %cst_38 = arith.constant 9.99999974E-6 : f32
    %80 = vector.broadcast %cst_38 : f32 to vector<8x1xf32>
    %81 = arith.addf %77, %80 : vector<8x1xf32>
    %82 = math.rsqrt %81 : vector<8x1xf32>
    %83 = vector.broadcast %82 : vector<8x1xf32> to vector<8x32xf32>
    %84 = arith.mulf %79, %83 : vector<8x32xf32>
    %85 = vector.broadcast %65 : vector<1x32xf32> to vector<8x32xf32>
    %86 = arith.mulf %84, %85 : vector<8x32xf32>
    %87 = vector.broadcast %66 : vector<1x32xf32> to vector<8x32xf32>
    %88 = arith.addf %86, %87 : vector<8x32xf32>
    %89 = arith.truncf %88 : vector<8x32xf32> to vector<8x32xbf16>
    %c0_39 = arith.constant 0 : index
    %c0_40 = arith.constant 0 : index
    %90 = vector.load %arg15[%c0_39, %c0_40] : memref<32x64xbf16, #tpu.memory_space<vmem>>, vector<32x64xbf16>
    %cst_41 = arith.constant dense<0.000000e+00> : vector<8x64xf32>
    %91 = tpu.matmul %89, %90, %cst_41 {dimension_numbers = #tpu.dot_dimension_numbers<[1], [0], [0], [1], [0, 0, 1, 1], [], []>} : vector<8x32xbf16>, vector<32x64xbf16>, vector<8x64xf32> -> vector<8x64xf32>
    %c0_42 = arith.constant 0 : index
    %c0_43 = arith.constant 0 : index
    %92 = vector.load %arg16[%c0_42, %c0_43] : memref<1x64xf32, #tpu.memory_space<vmem>>, vector<1x64xf32>
    %93 = vector.broadcast %92 : vector<1x64xf32> to vector<8x64xf32>
    %94 = arith.addf %91, %93 : vector<8x64xf32>
    %cst_44 = arith.constant 5.000000e-01 : f32
    %95 = vector.broadcast %cst_44 : f32 to vector<8x64xf32>
    %96 = arith.mulf %95, %94 : vector<8x64xf32>
    %cst_45 = arith.constant 4.471500e-02 : f32
    %97 = vector.broadcast %cst_45 : f32 to vector<8x64xf32>
    %98 = arith.mulf %97, %94 : vector<8x64xf32>
    %99 = arith.mulf %98, %94 : vector<8x64xf32>
    %100 = arith.mulf %99, %94 : vector<8x64xf32>
    %101 = arith.addf %94, %100 : vector<8x64xf32>
    %cst_46 = arith.constant 0.797884583 : f32
    %102 = vector.broadcast %cst_46 : f32 to vector<8x64xf32>
    %103 = arith.mulf %102, %101 : vector<8x64xf32>
    %104 = math.tanh %103 : vector<8x64xf32>
    %cst_47 = arith.constant 1.000000e+00 : f32
    %105 = vector.broadcast %cst_47 : f32 to vector<8x64xf32>
    %106 = arith.addf %105, %104 : vector<8x64xf32>
    %107 = arith.mulf %96, %106 : vector<8x64xf32>
    %108 = arith.truncf %107 : vector<8x64xf32> to vector<8x64xbf16>
    %c0_48 = arith.constant 0 : index
    %c0_49 = arith.constant 0 : index
    %109 = vector.load %arg17[%c0_48, %c0_49] : memref<64x32xbf16, #tpu.memory_space<vmem>>, vector<64x32xbf16>
    %cst_50 = arith.constant dense<0.000000e+00> : vector<8x32xf32>
    %110 = tpu.matmul %108, %109, %cst_50 {dimension_numbers = #tpu.dot_dimension_numbers<[1], [0], [0], [1], [0, 0, 1, 1], [], []>} : vector<8x64xbf16>, vector<64x32xbf16>, vector<8x32xf32> -> vector<8x32xf32>
    %c0_51 = arith.constant 0 : index
    %c0_52 = arith.constant 0 : index
    %111 = vector.load %arg18[%c0_51, %c0_52] : memref<1x32xf32, #tpu.memory_space<vmem>>, vector<1x32xf32>
    %112 = vector.broadcast %111 : vector<1x32xf32> to vector<8x32xf32>
    %113 = arith.addf %110, %112 : vector<8x32xf32>
    %114 = arith.addf %113, %64 : vector<8x32xf32>
    %c0_53 = arith.constant 0 : index
    %c0_54 = arith.constant 0 : index
    %c0_55 = arith.constant 0 : index
    %115 = vector.load %arg19[%c0_53, %c0_54, %c0_55] : memref<1x8x32xf32, #tpu.memory_space<vmem>>, vector<1x8x32xf32>
    %116 = vector.shape_cast %115 : vector<1x8x32xf32> to vector<8x32xf32>
    %117 = vector.shape_cast %114 : vector<8x32xf32> to vector<1x8x32xf32>
    tpu.vector_store %arg19[%c0_53, %c0_54, %c0_55], %117 {strides = array<i32>} : memref<1x8x32xf32, #tpu.memory_space<vmem>>, vector<1x8x32xf32>,
    return
  }
  func.func @transform_0(%arg0: i32, %arg1: i32) -> (i32, i32, i32) {
    %c0_i32 = arith.constant 0 : i32
    %c0_i32_0 = arith.constant 0 : i32
    %c0_i32_1 = arith.constant 0 : i32
    return %arg0, %c0_i32, %c0_i32_0 : i32, i32, i32
  }
  func.func @transform_1(%arg0: i32, %arg1: i32) -> (i32, i32) {
    %c0_i32 = arith.constant 0 : i32
    %c0_i32_0 = arith.constant 0 : i32
    %c0_i32_1 = arith.constant 0 : i32
    return %c0_i32, %c0_i32_0 : i32, i32
  }
  func.func @transform_2(%arg0: i32, %arg1: i32) -> (i32, i32) {
    %c0_i32 = arith.constant 0 : i32
    %c0_i32_0 = arith.constant 0 : i32
    %c0_i32_1 = arith.constant 0 : i32
    return %c0_i32, %c0_i32_0 : i32, i32
  }
  func.func @transform_3(%arg0: i32, %arg1: i32) -> (i32, i32) {
    %c0_i32 = arith.constant 0 : i32
    %c0_i32_0 = arith.constant 0 : i32
    %c0_i32_1 = arith.constant 0 : i32
    return %c0_i32, %c0_i32_0 : i32, i32
  }
  func.func @transform_4(%arg0: i32, %arg1: i32) -> (i32, i32) {
    %c0_i32 = arith.constant 0 : i32
    %c0_i32_0 = arith.constant 0 : i32
    %c0_i32_1 = arith.constant 0 : i32
    return %c0_i32, %c0_i32_0 : i32, i32
  }
  func.func @transform_5(%arg0: i32, %arg1: i32) -> (i32, i32) {
    %c0_i32 = arith.constant 0 : i32
    %c0_i32_0 = arith.constant 0 : i32
    %c0_i32_1 = arith.constant 0 : i32
    return %c0_i32, %c0_i32_0 : i32, i32
  }
  func.func @transform_6(%arg0: i32, %arg1: i32) -> (i32, i32) {
    %c0_i32 = arith.constant 0 : i32
    %c0_i32_0 = arith.constant 0 : i32
    %c0_i32_1 = arith.constant 0 : i32
    return %c0_i32, %c0_i32_0 : i32, i32
  }
  func.func @transform_7(%arg0: i32, %arg1: i32) -> (i32, i32) {
    %c0_i32 = arith.constant 0 : i32
    %c0_i32_0 = arith.constant 0 : i32
    %c0_i32_1 = arith.constant 0 : i32
    return %c0_i32, %c0_i32_0 : i32, i32
  }
  func.func @transform_8(%arg0: i32, %arg1: i32) -> (i32, i32) {
    %c0_i32 = arith.constant 0 : i32
    %c0_i32_0 = arith.constant 0 : i32
    %c0_i32_1 = arith.constant 0 : i32
    return %c0_i32, %c0_i32_0 : i32, i32
  }
  func.func @transform_9(%arg0: i32, %arg1: i32) -> (i32, i32) {
    %c0_i32 = arith.constant 0 : i32
    %c0_i32_0 = arith.constant 0 : i32
    %c0_i32_1 = arith.constant 0 : i32
    return %c0_i32, %c0_i32_0 : i32, i32
  }
  func.func @transform_10(%arg0: i32, %arg1: i32) -> (i32, i32) {
    %c0_i32 = arith.constant 0 : i32
    %c0_i32_0 = arith.constant 0 : i32
    %c0_i32_1 = arith.constant 0 : i32
    return %c0_i32, %c0_i32_0 : i32, i32
  }
  func.func @transform_11(%arg0: i32, %arg1: i32) -> (i32, i32) {
    %c0_i32 = arith.constant 0 : i32
    %c0_i32_0 = arith.constant 0 : i32
    %c0_i32_1 = arith.constant 0 : i32
    return %c0_i32, %c0_i32_0 : i32, i32
  }
  func.func @transform_12(%arg0: i32, %arg1: i32) -> (i32, i32) {
    %c0_i32 = arith.constant 0 : i32
    %c0_i32_0 = arith.constant 0 : i32
    %c0_i32_1 = arith.constant 0 : i32
    return %c0_i32, %c0_i32_0 : i32, i32
  }
  func.func @transform_13(%arg0: i32, %arg1: i32) -> (i32, i32) {
    %c0_i32 = arith.constant 0 : i32
    %c0_i32_0 = arith.constant 0 : i32
    %c0_i32_1 = arith.constant 0 : i32
    return %c0_i32, %c0_i32_0 : i32, i32
  }
  func.func @transform_14(%arg0: i32, %arg1: i32) -> (i32, i32) {
    %c0_i32 = arith.constant 0 : i32
    %c0_i32_0 = arith.constant 0 : i32
    %c0_i32_1 = arith.constant 0 : i32
    return %c0_i32, %c0_i32_0 : i32, i32
  }
  func.func @transform_15(%arg0: i32, %arg1: i32) -> (i32, i32) {
    %c0_i32 = arith.constant 0 : i32
    %c0_i32_0 = arith.constant 0 : i32
    %c0_i32_1 = arith.constant 0 : i32
    return %c0_i32, %c0_i32_0 : i32, i32
  }
  func.func @transform_16(%arg0: i32, %arg1: i32) -> (i32, i32) {
    %c0_i32 = arith.constant 0 : i32
    %c0_i32_0 = arith.constant 0 : i32
    %c0_i32_1 = arith.constant 0 : i32
    return %c0_i32, %c0_i32_0 : i32, i32
  }
  func.func @transform_17(%arg0: i32, %arg1: i32) -> (i32, i32, i32) {
    %c0_i32 = arith.constant 0 : i32
    %c0_i32_0 = arith.constant 0 : i32
    return %arg0, %arg1, %c0_i32 : i32, i32, i32
  }
}

</mosaic_0001>

<llo_original>
// kernel: tpu_custom_call.1
$region0: #{tpu_custom_call.1}
  #allocation0 [shape = 'u32[]', space=smem, size = 0x4, offset = 0x4, fixed_abs, tag = 'smem constant byte address 0x4 - core index']
  #allocation1 [shape = 'u32[144,128]{1,0:T(1,128)}', space=vmem, size = 0x12000, scoped, tag = 'internal scratch']
  #allocation2 [shape = 'bf16[4,8,8]{2,1,0:T(8,128)(2,1)}', space=vmem, size = 0x2000, scoped, tag = 'scratch operand']
  #allocation3 [shape = 'bf16[4,8,8]{2,1,0:T(8,128)(2,1)}', space=vmem, size = 0x2000, scoped, tag = 'scratch operand']
  %s0 = inlined_call_operand.vmem [shape: f32[2,8,32], index: 0, kind: input, shape index: {}]
  %s1 = inlined_call_operand.vmem [shape: f32[1,32], index: 1, kind: input, shape index: {}]
  %s2 = inlined_call_operand.hbm [shape: f32[1,32], index: 2, kind: input, shape index: {}]
  %s3 = inlined_call_operand.vmem [shape: bf16[32,32], index: 3, kind: input, shape index: {}]
  %s4 = inlined_call_operand.hbm [shape: f32[1,32], index: 4, kind: input, shape index: {}]
  %s5 = inlined_call_operand.vmem [shape: bf16[32,32], index: 5, kind: input, shape index: {}]
  %s6 = inlined_call_operand.hbm [shape: f32[1,32], index: 6, kind: input, shape index: {}]
  %s7 = inlined_call_operand.hbm [shape: bf16[32,32], index: 7, kind: input, shape index: {}]
  %s8 = inlined_call_operand.hbm [shape: f32[1,32], index: 8, kind: input, shape index: {}]
  %s9 = inlined_call_operand.vmem [shape: bf16[32,32], index: 9, kind: input, shape index: {}]
  %s10 = inlined_call_operand.hbm [shape: f32[1,32], index: 10, kind: input, shape index: {}]
  %s11 = inlined_call_operand.hbm [shape: f32[1,32], index: 11, kind: input, shape index: {}]
  %s12 = inlined_call_operand.hbm [shape: f32[1,32], index: 12, kind: input, shape index: {}]
  %s13 = inlined_call_operand.vmem [shape: bf16[32,64], index: 13, kind: input, shape index: {}]
  %s14 = inlined_call_operand.vmem [shape: f32[1,64], index: 14, kind: input, shape index: {}]
  %s15 = inlined_call_operand.vmem [shape: bf16[64,32], index: 15, kind: input, shape index: {}]
  %s16 = inlined_call_operand.vmem [shape: f32[1,32], index: 16, kind: input, shape index: {}]
  %s17 = inlined_call_operand.hbm [shape: f32[2,8,32], index: 17, kind: output, shape index: {}]
  %s18 = sld [smem:[#allocation0]]
  $region137: #{tpu_custom_call.1} parent=0
    _
  %s20 = ssub.s32 1, %s18
  %s21 = scalar_select 0, %s20, %s18
  $region1: #{tpu_custom_call.1} parent=0
    #allocation4 [shape = 'u8[512]{0}', space=vmem, size = 0x400, scoped, tag = 'input window, operand 2, single buffered']
    #allocation5 [shape = 's32[2]{0}', space=sflag, size = 0x8, scoped, tag = 'scoped memory for tpu_custom_call.1']
    #allocation6 [shape = 's32[2]{0}', space=sflag, size = 0x8, scoped, tag = 'scoped memory for tpu_custom_call.1']
    #allocation7 [shape = 'u8[512]{0}', space=vmem, size = 0x400, scoped, tag = 'input window, operand 4, single buffered']
    #allocation8 [shape = 's32[1]{0}', space=sflag, size = 0x4, scoped, tag = 'scoped memory for tpu_custom_call.1']
    #allocation9 [shape = 'u8[512]{0}', space=vmem, size = 0x400, scoped, tag = 'input window, operand 6, single buffered']
    #allocation10 [shape = 'u8[8192]{0}', space=vmem, size = 0x2000, scoped, tag = 'input window, operand 7, single buffered']
    #allocation11 [shape = 's32[1]{0}', space=sflag, size = 0x4, scoped, tag = 'scoped memory for tpu_custom_call.1']
    #allocation12 [shape = 'u8[512]{0}', space=vmem, size = 0x400, scoped, tag = 'input window, operand 8, single buffered']
    #allocation13 [shape = 'u8[512]{0}', space=vmem, size = 0x400, scoped, tag = 'input window, operand 10, single buffered']
    #allocation14 [shape = 's32[1]{0}', space=sflag, size = 0x4, scoped, tag = 'scoped memory for tpu_custom_call.1']
    #allocation15 [shape = 'u8[512]{0}', space=vmem, size = 0x400, scoped, tag = 'input window, operand 11, single buffered']
    #allocation16 [shape = 'u8[512]{0}', space=vmem, size = 0x400, scoped, tag = 'input window, operand 12, single buffered']
    #allocation17 [shape = 's32[1]{0}', space=sflag, size = 0x4, scoped, tag = 'scoped memory for tpu_custom_call.1']
    #allocation18 [shape = 'u8[8192]{0}', space=vmem, size = 0x2000, scoped, tag = 'output window, operand 0']
    %22 = vsyncpa [#allocation5], 0
    %23 = vsyncpa [#allocation8], 0
    %24 = vsyncpa [#allocation11], 0
    %25 = vsyncpa [#allocation14], 0
    %26 = vsyncpa [#allocation17], 0
    %27 = vsyncpa [#allocation6], 0
    %s28 = scalar_lea.sflag [#allocation6], 1
    %29 = vsyncpa %s28, 0
    loop: start=0, step=1, limit=4
    $region2: #{tpu_custom_call.1} parent=1 // loop_pre_header
      _
    $region3: #{tpu_custom_call.1} parent=1 // loop_header
      %s31 = sphi 0, %s35
      %p32 = scmp.ge.s32.totalorder %s31, 4
      %s38 = sphi 0, %s50
      %s39 = sphi 0, %s46
      %s40 = sphi 0, %s38
      %s41 = sphi 0, %s39
      %s42 = sphi 0, %s40
      %s43 = sphi 0, %s41
      %s53 = sphi 0, %s55
      %s56 = sphi 0, %s53
      %s57 = sphi 0, %s56
      %s73 = sphi 0, %s57
      %s77 = sphi 0, %s77
      %s79 = sphi 0, %s77
      %s80 = sphi 0, %s79
      %s94 = sphi 0, %s80
      %s98 = sphi 0, %s98
      %s100 = sphi 0, %s98
      %s101 = sphi 0, %s100
      %s115 = sphi 0, %s101
      %s119 = sphi 0, %s119
      %s121 = sphi 0, %s119
      %s122 = sphi 0, %s121
      %s136 = sphi 0, %s122
      %s140 = sphi 0, %s140
      %s142 = sphi 0, %s140
      %s143 = sphi 0, %s142
      %s157 = sphi 0, %s143
      %s161 = sphi 0, %s161
      %s163 = sphi 0, %s161
      %s164 = sphi 0, %s163
      %s178 = sphi 0, %s164
      %s182 = sphi 0, %s182
      %s184 = sphi 0, %s182
      %s185 = sphi 0, %s184
      %s199 = sphi 0, %s185
      %s203 = sphi 0, %s203
      %s205 = sphi 0, %s203
      %s206 = sphi 0, %s205
      %s220 = sphi 0, %s206
      %s224 = sphi 0, %s224
      %s226 = sphi 0, %s224
      %s227 = sphi 0, %s226
      %s241 = sphi 0, %s227
      %s245 = sphi 0, %s245
      %s247 = sphi 0, %s245
      %s248 = sphi 0, %s247
      %s262 = sphi 0, %s248
      %s266 = sphi 0, %s266
      %s268 = sphi 0, %s266
      %s269 = sphi 0, %s268
      %s283 = sphi 0, %s269
      %s287 = sphi 0, %s287
      %s289 = sphi 0, %s287
      %s290 = sphi 0, %s289
      %s304 = sphi 0, %s290
      %s308 = sphi 0, %s308
      %s310 = sphi 0, %s308
      %s311 = sphi 0, %s310
      %s325 = sphi 0, %s311
      %s329 = sphi 0, %s329
      %s331 = sphi 0, %s329
      %s332 = sphi 0, %s331
      %s346 = sphi 0, %s332
      %s350 = sphi 0, %s350
      %s352 = sphi 0, %s350
      %s353 = sphi 0, %s352
      %s367 = sphi 0, %s353
      %s371 = sphi 0, %s371
      %s373 = sphi 0, %s371
      %s374 = sphi 0, %s373
      %s388 = sphi 0, %s374
      %s392 = sphi 0, %s392
      %s394 = sphi 0, %s392
      %s395 = sphi 0, %s394
      %s409 = sphi 0, %s395
      %s417 = sphi 0, %s419
      %s420 = sphi 0, %s417
      %s421 = sphi 0, %s420
      %s437 = sphi 0, %s421
    $region4: #{tpu_custom_call.1} parent=1 // loop_header_branch
      %34 = sbr.rel (%p32) target = $region8
    $region5: #{tpu_custom_call.1} parent=1 // loop_body
      %s36 = ssub.s32 %s31, 1
      %s37 = ssub.s32 %s31, 2
      %s44 = sadd.s32 1, %s39
      %p45 = scmp.ge.s32.totalorder %s44, 1
      %s46 = scalar_select %p45, 0, %s44
      %s47 = sadd.s32 1, %s38
      %s48 = scalar_select %p45, %s47, %s38
      %p49 = scmp.ge.s32.totalorder %s48, 2
      %s50 = scalar_select %p49, 0, %s48
      %s51 = ssub.s32 %s38, %s50
      %p52 = scmp.eq.s32.totalorder %s51, 0
      %s54 = sadd.s32 %s53, 1
      %s55 = scalar_select %p52, %s53, %s54
      %p58 = pneg %p52
      %p59 = scmp.eq.s32.totalorder %s31, 1
      %p60 = por %p58, %p59
      %p61 = scmp.ne.s32.totalorder %s53, %s56
      %p62 = scmp.eq.s32.totalorder %s31, 0
      %p63 = por %p61, %p62
      %p64 = scmp.ne.s32.totalorder %s53, %s56
      %p65 = scmp.eq.s32.totalorder %s36, 1
      %p66 = por %p64, %p65
      %p67 = scmp.ne.s32.totalorder %s56, %s57
      %p68 = scmp.eq.s32.totalorder %s36, 0
      %p69 = por %p67, %p68
      %p70 = scmp.ne.s32.totalorder %s56, %s57
      %p71 = scmp.eq.s32.totalorder %s37, 1
      %p72 = por %p70, %p71
      %p74 = scmp.ne.s32.totalorder %s57, %s73
      %p75 = scmp.eq.s32.totalorder %s37, 0
      %p76 = por %p74, %p75
      %s78 = sadd.s32 %s77, 1
      %p81 = scmp.eq.s32.totalorder %s31, 1
      %p82 = scmp.ne.s32.totalorder %s77, %s79
      %p83 = scmp.eq.s32.totalorder %s31, 0
      %p84 = por %p82, %p83
      %p85 = scmp.ne.s32.totalorder %s77, %s79
      %p86 = scmp.eq.s32.totalorder %s36, 1
      %p87 = por %p85, %p86
      %p88 = scmp.ne.s32.totalorder %s79, %s80
      %p89 = scmp.eq.s32.totalorder %s36, 0
      %p90 = por %p88, %p89
      %p91 = scmp.ne.s32.totalorder %s79, %s80
      %p92 = scmp.eq.s32.totalorder %s37, 1
      %p93 = por %p91, %p92
      %p95 = scmp.ne.s32.totalorder %s80, %s94
      %p96 = scmp.eq.s32.totalorder %s37, 0
      %p97 = por %p95, %p96
      %s99 = sadd.s32 %s98, 1
      %p102 = scmp.eq.s32.totalorder %s31, 1
      %p103 = scmp.ne.s32.totalorder %s98, %s100
      %p104 = scmp.eq.s32.totalorder %s31, 0
      %p105 = por %p103, %p104
      %p106 = scmp.ne.s32.totalorder %s98, %s100
      %p107 = scmp.eq.s32.totalorder %s36, 1
      %p108 = por %p106, %p107
      %p109 = scmp.ne.s32.totalorder %s100, %s101
      %p110 = scmp.eq.s32.totalorder %s36, 0
      %p111 = por %p109, %p110
      %p112 = scmp.ne.s32.totalorder %s100, %s101
      %p113 = scmp.eq.s32.totalorder %s37, 1
      %p114 = por %p112, %p113
      %p116 = scmp.ne.s32.totalorder %s101, %s115
      %p117 = scmp.eq.s32.totalorder %s37, 0
      %p118 = por %p116, %p117
      %s120 = sadd.s32 %s119, 1
      %p123 = scmp.eq.s32.totalorder %s31, 1
      %p124 = scmp.ne.s32.totalorder %s119, %s121
      %p125 = scmp.eq.s32.totalorder %s31, 0
      %p126 = por %p124, %p125
      %p127 = scmp.ne.s32.totalorder %s119, %s121
      %p128 = scmp.eq.s32.totalorder %s36, 1
      %p129 = por %p127, %p128
      %p130 = scmp.ne.s32.totalorder %s121, %s122
      %p131 = scmp.eq.s32.totalorder %s36, 0
      %p132 = por %p130, %p131
      %p133 = scmp.ne.s32.totalorder %s121, %s122
      %p134 = scmp.eq.s32.totalorder %s37, 1
      %p135 = por %p133, %p134
      %p137 = scmp.ne.s32.totalorder %s122, %s136
      %p138 = scmp.eq.s32.totalorder %s37, 0
      %p139 = por %p137, %p138
      %s141 = sadd.s32 %s140, 1
      %p144 = scmp.eq.s32.totalorder %s31, 1
      %p145 = scmp.ne.s32.totalorder %s140, %s142
      %p146 = scmp.eq.s32.totalorder %s31, 0
      %p147 = por %p145, %p146
      %p148 = scmp.ne.s32.totalorder %s140, %s142
      %p149 = scmp.eq.s32.totalorder %s36, 1
      %p150 = por %p148, %p149
      %p151 = scmp.ne.s32.totalorder %s142, %s143
      %p152 = scmp.eq.s32.totalorder %s36, 0
      %p153 = por %p151, %p152
      %p154 = scmp.ne.s32.totalorder %s142, %s143
      %p155 = scmp.eq.s32.totalorder %s37, 1
      %p156 = por %p154, %p155
      %p158 = scmp.ne.s32.totalorder %s143, %s157
      %p159 = scmp.eq.s32.totalorder %s37, 0
      %p160 = por %p158, %p159
      %s162 = sadd.s32 %s161, 1
      %p165 = scmp.eq.s32.totalorder %s31, 1
      %p166 = scmp.ne.s32.totalorder %s161, %s163
      %p167 = scmp.eq.s32.totalorder %s31, 0
      %p168 = por %p166, %p167
      %p169 = scmp.ne.s32.totalorder %s161, %s163
      %p170 = scmp.eq.s32.totalorder %s36, 1
      %p171 = por %p169, %p170
      %p172 = scmp.ne.s32.totalorder %s163, %s164
      %p173 = scmp.eq.s32.totalorder %s36, 0
      %p174 = por %p172, %p173
      %p175 = scmp.ne.s32.totalorder %s163, %s164
      %p176 = scmp.eq.s32.totalorder %s37, 1
      %p177 = por %p175, %p176
      %p179 = scmp.ne.s32.totalorder %s164, %s178
      %p180 = scmp.eq.s32.totalorder %s37, 0
      %p181 = por %p179, %p180
      %s183 = sadd.s32 %s182, 1
      %p186 = scmp.eq.s32.totalorder %s31, 1
      %p187 = scmp.ne.s32.totalorder %s182, %s184
      %p188 = scmp.eq.s32.totalorder %s31, 0
      %p189 = por %p187, %p188
      %p190 = scmp.ne.s32.totalorder %s182, %s184
      %p191 = scmp.eq.s32.totalorder %s36, 1
      %p192 = por %p190, %p191
      %p193 = scmp.ne.s32.totalorder %s184, %s185
      %p194 = scmp.eq.s32.totalorder %s36, 0
      %p195 = por %p193, %p194
      %p196 = scmp.ne.s32.totalorder %s184, %s185
      %p197 = scmp.eq.s32.totalorder %s37, 1
      %p198 = por %p196, %p197
      %p200 = scmp.ne.s32.totalorder %s185, %s199
      %p201 = scmp.eq.s32.totalorder %s37, 0
      %p202 = por %p200, %p201
      %s204 = sadd.s32 %s203, 1
      %p207 = scmp.eq.s32.totalorder %s31, 1
      %p208 = scmp.ne.s32.totalorder %s203, %s205
      %p209 = scmp.eq.s32.totalorder %s31, 0
      %p210 = por %p208, %p209
      %p211 = scmp.ne.s32.totalorder %s203, %s205
      %p212 = scmp.eq.s32.totalorder %s36, 1
      %p213 = por %p211, %p212
      %p214 = scmp.ne.s32.totalorder %s205, %s206
      %p215 = scmp.eq.s32.totalorder %s36, 0
      %p216 = por %p214, %p215
      %p217 = scmp.ne.s32.totalorder %s205, %s206
      %p218 = scmp.eq.s32.totalorder %s37, 1
      %p219 = por %p217, %p218
      %p221 = scmp.ne.s32.totalorder %s206, %s220
      %p222 = scmp.eq.s32.totalorder %s37, 0
      %p223 = por %p221, %p222
      %s225 = sadd.s32 %s224, 1
      %p228 = scmp.eq.s32.totalorder %s31, 1
      %p229 = scmp.ne.s32.totalorder %s224, %s226
      %p230 = scmp.eq.s32.totalorder %s31, 0
      %p231 = por %p229, %p230
      %p232 = scmp.ne.s32.totalorder %s224, %s226
      %p233 = scmp.eq.s32.totalorder %s36, 1
      %p234 = por %p232, %p233
      %p235 = scmp.ne.s32.totalorder %s226, %s227
      %p236 = scmp.eq.s32.totalorder %s36, 0
      %p237 = por %p235, %p236
      %p238 = scmp.ne.s32.totalorder %s226, %s227
      %p239 = scmp.eq.s32.totalorder %s37, 1
      %p240 = por %p238, %p239
      %p242 = scmp.ne.s32.totalorder %s227, %s241
      %p243 = scmp.eq.s32.totalorder %s37, 0
      %p244 = por %p242, %p243
      %s246 = sadd.s32 %s245, 1
      %p249 = scmp.eq.s32.totalorder %s31, 1
      %p250 = scmp.ne.s32.totalorder %s245, %s247
      %p251 = scmp.eq.s32.totalorder %s31, 0
      %p252 = por %p250, %p251
      %p253 = scmp.ne.s32.totalorder %s245, %s247
      %p254 = scmp.eq.s32.totalorder %s36, 1
      %p255 = por %p253, %p254
      %p256 = scmp.ne.s32.totalorder %s247, %s248
      %p257 = scmp.eq.s32.totalorder %s36, 0
      %p258 = por %p256, %p257
      %p259 = scmp.ne.s32.totalorder %s247, %s248
      %p260 = scmp.eq.s32.totalorder %s37, 1
      %p261 = por %p259, %p260
      %p263 = scmp.ne.s32.totalorder %s248, %s262
      %p264 = scmp.eq.s32.totalorder %s37, 0
      %p265 = por %p263, %p264
      %s267 = sadd.s32 %s266, 1
      %p270 = scmp.eq.s32.totalorder %s31, 1
      %p271 = scmp.ne.s32.totalorder %s266, %s268
      %p272 = scmp.eq.s32.totalorder %s31, 0
      %p273 = por %p271, %p272
      %p274 = scmp.ne.s32.totalorder %s266, %s268
      %p275 = scmp.eq.s32.totalorder %s36, 1
      %p276 = por %p274, %p275
      %p277 = scmp.ne.s32.totalorder %s268, %s269
      %p278 = scmp.eq.s32.totalorder %s36, 0
      %p279 = por %p277, %p278
      %p280 = scmp.ne.s32.totalorder %s268, %s269
      %p281 = scmp.eq.s32.totalorder %s37, 1
      %p282 = por %p280, %p281
      %p284 = scmp.ne.s32.totalorder %s269, %s283
      %p285 = scmp.eq.s32.totalorder %s37, 0
      %p286 = por %p284, %p285
      %s288 = sadd.s32 %s287, 1
      %p291 = scmp.eq.s32.totalorder %s31, 1
      %p292 = scmp.ne.s32.totalorder %s287, %s289
      %p293 = scmp.eq.s32.totalorder %s31, 0
      %p294 = por %p292, %p293
      %p295 = scmp.ne.s32.totalorder %s287, %s289
      %p296 = scmp.eq.s32.totalorder %s36, 1
      %p297 = por %p295, %p296
      %p298 = scmp.ne.s32.totalorder %s289, %s290
      %p299 = scmp.eq.s32.totalorder %s36, 0
      %p300 = por %p298, %p299
      %p301 = scmp.ne.s32.totalorder %s289, %s290
      %p302 = scmp.eq.s32.totalorder %s37, 1
      %p303 = por %p301, %p302
      %p305 = scmp.ne.s32.totalorder %s290, %s304
      %p306 = scmp.eq.s32.totalorder %s37, 0
      %p307 = por %p305, %p306
      %s309 = sadd.s32 %s308, 1
      %p312 = scmp.eq.s32.totalorder %s31, 1
      %p313 = scmp.ne.s32.totalorder %s308, %s310
      %p314 = scmp.eq.s32.totalorder %s31, 0
      %p315 = por %p313, %p314
      %p316 = scmp.ne.s32.totalorder %s308, %s310
      %p317 = scmp.eq.s32.totalorder %s36, 1
      %p318 = por %p316, %p317
      %p319 = scmp.ne.s32.totalorder %s310, %s311
      %p320 = scmp.eq.s32.totalorder %s36, 0
      %p321 = por %p319, %p320
      %p322 = scmp.ne.s32.totalorder %s310, %s311
      %p323 = scmp.eq.s32.totalorder %s37, 1
      %p324 = por %p322, %p323
      %p326 = scmp.ne.s32.totalorder %s311, %s325
      %p327 = scmp.eq.s32.totalorder %s37, 0
      %p328 = por %p326, %p327
      %s330 = sadd.s32 %s329, 1
      %p333 = scmp.eq.s32.totalorder %s31, 1
      %p334 = scmp.ne.s32.totalorder %s329, %s331
      %p335 = scmp.eq.s32.totalorder %s31, 0
      %p336 = por %p334, %p335
      %p337 = scmp.ne.s32.totalorder %s329, %s331
      %p338 = scmp.eq.s32.totalorder %s36, 1
      %p339 = por %p337, %p338
      %p340 = scmp.ne.s32.totalorder %s331, %s332
      %p341 = scmp.eq.s32.totalorder %s36, 0
      %p342 = por %p340, %p341
      %p343 = scmp.ne.s32.totalorder %s331, %s332
      %p344 = scmp.eq.s32.totalorder %s37, 1
      %p345 = por %p343, %p344
      %p347 = scmp.ne.s32.totalorder %s332, %s346
      %p348 = scmp.eq.s32.totalorder %s37, 0
      %p349 = por %p347, %p348
      %s351 = sadd.s32 %s350, 1
      %p354 = scmp.eq.s32.totalorder %s31, 1
      %p355 = scmp.ne.s32.totalorder %s350, %s352
      %p356 = scmp.eq.s32.totalorder %s31, 0
      %p357 = por %p355, %p356
      %p358 = scmp.ne.s32.totalorder %s350, %s352
      %p359 = scmp.eq.s32.totalorder %s36, 1
      %p360 = por %p358, %p359
      %p361 = scmp.ne.s32.totalorder %s352, %s353
      %p362 = scmp.eq.s32.totalorder %s36, 0
      %p363 = por %p361, %p362
      %p364 = scmp.ne.s32.totalorder %s352, %s353
      %p365 = scmp.eq.s32.totalorder %s37, 1
      %p366 = por %p364, %p365
      %p368 = scmp.ne.s32.totalorder %s353, %s367
      %p369 = scmp.eq.s32.totalorder %s37, 0
      %p370 = por %p368, %p369
      %s372 = sadd.s32 %s371, 1
      %p375 = scmp.eq.s32.totalorder %s31, 1
      %p376 = scmp.ne.s32.totalorder %s371, %s373
      %p377 = scmp.eq.s32.totalorder %s31, 0
      %p378 = por %p376, %p377
      %p379 = scmp.ne.s32.totalorder %s371, %s373
      %p380 = scmp.eq.s32.totalorder %s36, 1
      %p381 = por %p379, %p380
      %p382 = scmp.ne.s32.totalorder %s373, %s374
      %p383 = scmp.eq.s32.totalorder %s36, 0
      %p384 = por %p382, %p383
      %p385 = scmp.ne.s32.totalorder %s373, %s374
      %p386 = scmp.eq.s32.totalorder %s37, 1
      %p387 = por %p385, %p386
      %p389 = scmp.ne.s32.totalorder %s374, %s388
      %p390 = scmp.eq.s32.totalorder %s37, 0
      %p391 = por %p389, %p390
      %s393 = sadd.s32 %s392, 1
      %p396 = scmp.eq.s32.totalorder %s31, 1
      %p397 = scmp.ne.s32.totalorder %s392, %s394
      %p398 = scmp.eq.s32.totalorder %s31, 0
      %p399 = por %p397, %p398
      %p400 = scmp.ne.s32.totalorder %s392, %s394
      %p401 = scmp.eq.s32.totalorder %s36, 1
      %p402 = por %p400, %p401
      %p403 = scmp.ne.s32.totalorder %s394, %s395
      %p404 = scmp.eq.s32.totalorder %s36, 0
      %p405 = por %p403, %p404
      %p406 = scmp.ne.s32.totalorder %s394, %s395
      %p407 = scmp.eq.s32.totalorder %s37, 1
      %p408 = por %p406, %p407
      %p410 = scmp.ne.s32.totalorder %s395, %s409
      %p411 = scmp.eq.s32.totalorder %s37, 0
      %p412 = por %p410, %p411
      %s413 = ssub.s32 %s38, %s50
      %s414 = ssub.s32 %s39, %s46
      %s415 = sor.u32 %s413, %s414
      %p416 = scmp.eq.s32.totalorder %s415, 0
      %s418 = sadd.s32 %s417, 1
      %s419 = scalar_select %p416, %s417, %s418
      %p422 = pneg %p416
      %p423 = scmp.eq.s32.totalorder %s31, 1
      %p424 = por %p422, %p423
      %p425 = scmp.ne.s32.totalorder %s417, %s420
      %p426 = scmp.eq.s32.totalorder %s31, 0
      %p427 = por %p425, %p426
      %p428 = scmp.ne.s32.totalorder %s417, %s420
      %p429 = scmp.eq.s32.totalorder %s36, 1
      %p430 = por %p428, %p429
      %p431 = scmp.ne.s32.totalorder %s420, %s421
      %p432 = scmp.eq.s32.totalorder %s36, 0
      %p433 = por %p431, %p432
      %p434 = scmp.ne.s32.totalorder %s420, %s421
      %p435 = scmp.eq.s32.totalorder %s37, 1
      %p436 = por %p434, %p435
      %p438 = scmp.ne.s32.totalorder %s421, %s437
      %p439 = scmp.eq.s32.totalorder %s37, 0
      %p440 = por %p438, %p439
      %p441 = scmp.le.s32.totalorder 1, %s31
      %p442 = scmp.lt.s32.totalorder %s31, 3
      %p443 = pnand %p441, %p442
      %p444 = pneg %p443
      // Predicated region
      $region9: #{tpu_custom_call.1} parent=5 // pred_check
        _
      $region10: #{tpu_custom_call.1} parent=5 // pred_check_branch
        %446 = sbr.rel (%p443) target = $region12
      $region11: #{tpu_custom_call.1} parent=5 // pred_region
        %s447 = ssub.s32 %s31, 1
        // Predicated region
        $region13: #{tpu_custom_call.1} parent=11 // pred_check
          %p448 = pneg %p90
        $region14: #{tpu_custom_call.1} parent=11 // pred_check_branch
          %450 = sbr.rel (%p448) target = $region16
        $region15: #{tpu_custom_call.1} parent=11 // pred_region
          _
        $region16: #{tpu_custom_call.1} parent=11 // pred_fallthru
          _
        // Predicated region
        $region17: #{tpu_custom_call.1} parent=11 // pred_check
          %p451 = pneg %p111
        $region18: #{tpu_custom_call.1} parent=11 // pred_check_branch
          %453 = sbr.rel (%p451) target = $region20
        $region19: #{tpu_custom_call.1} parent=11 // pred_region
          %s455 = ssub.s32 16, 16
          %456 = vsyncadd [#allocation5], %s455
          %s458 = sshll.u32 [#allocation4], 4
          %s459 = int_to_ptr.vmem [resolvable:$true] %s458
          %461 = dma.hbm_to_vmem [thread:$0]  %s2, 16, %s459, [#allocation5]
        $region20: #{tpu_custom_call.1} parent=11 // pred_fallthru
          _
        // Predicated region
        $region21: #{tpu_custom_call.1} parent=11 // pred_check
          %p462 = pneg %p132
        $region22: #{tpu_custom_call.1} parent=11 // pred_check_branch
          %464 = sbr.rel (%p462) target = $region24
        $region23: #{tpu_custom_call.1} parent=11 // pred_region
          _
        $region24: #{tpu_custom_call.1} parent=11 // pred_fallthru
          _
        // Predicated region
        $region25: #{tpu_custom_call.1} parent=11 // pred_check
          %p465 = pneg %p153
        $region26: #{tpu_custom_call.1} parent=11 // pred_check_branch
          %467 = sbr.rel (%p465) target = $region28
        $region27: #{tpu_custom_call.1} parent=11 // pred_region
          %s469 = ssub.s32 16, 16
          %470 = vsyncadd [#allocation8], %s469
          %s472 = sshll.u32 [#allocation7], 4
          %s473 = int_to_ptr.vmem [resolvable:$true] %s472
          %475 = dma.hbm_to_vmem [thread:$0]  %s4, 16, %s473, [#allocation8]
        $region28: #{tpu_custom_call.1} parent=11 // pred_fallthru
          _
        // Predicated region
        $region29: #{tpu_custom_call.1} parent=11 // pred_check
          %p476 = pneg %p174
        $region30: #{tpu_custom_call.1} parent=11 // pred_check_branch
          %478 = sbr.rel (%p476) target = $region32
        $region31: #{tpu_custom_call.1} parent=11 // pred_region
          _
        $region32: #{tpu_custom_call.1} parent=11 // pred_fallthru
          _
        // Predicated region
        $region33: #{tpu_custom_call.1} parent=11 // pred_check
          %p479 = pneg %p195
        $region34: #{tpu_custom_call.1} parent=11 // pred_check_branch
          %481 = sbr.rel (%p479) target = $region36
        $region35: #{tpu_custom_call.1} parent=11 // pred_region
          %s483 = ssub.s32 16, 16
          %484 = vsyncadd [#allocation8], %s483
          %s486 = sshll.u32 [#allocation9], 4
          %s487 = int_to_ptr.vmem [resolvable:$true] %s486
          %489 = dma.hbm_to_vmem [thread:$0]  %s6, 16, %s487, [#allocation8]
        $region36: #{tpu_custom_call.1} parent=11 // pred_fallthru
          _
        // Predicated region
        $region37: #{tpu_custom_call.1} parent=11 // pred_check
          %p490 = pneg %p216
        $region38: #{tpu_custom_call.1} parent=11 // pred_check_branch
          %492 = sbr.rel (%p490) target = $region40
        $region39: #{tpu_custom_call.1} parent=11 // pred_region
          %s494 = ssub.s32 256, 256
          %495 = vsyncadd [#allocation11], %s494
          %s496 = sshll.u32 [#allocation10], 4
          %s497 = int_to_ptr.vmem [resolvable:$true] %s496
          %502 = dma.hbm_to_vmem [thread:$0]  %s7, 256, %s497, [#allocation11], 64, 64, 4
        $region40: #{tpu_custom_call.1} parent=11 // pred_fallthru
          _
        // Predicated region
        $region41: #{tpu_custom_call.1} parent=11 // pred_check
          %p503 = pneg %p237
        $region42: #{tpu_custom_call.1} parent=11 // pred_check_branch
          %505 = sbr.rel (%p503) target = $region44
        $region43: #{tpu_custom_call.1} parent=11 // pred_region
          %s507 = ssub.s32 16, 16
          %508 = vsyncadd [#allocation11], %s507
          %s510 = sshll.u32 [#allocation12], 4
          %s511 = int_to_ptr.vmem [resolvable:$true] %s510
          %513 = dma.hbm_to_vmem [thread:$0]  %s8, 16, %s511, [#allocation11]
        $region44: #{tpu_custom_call.1} parent=11 // pred_fallthru
          _
        // Predicated region
        $region45: #{tpu_custom_call.1} parent=11 // pred_check
          %p514 = pneg %p258
        $region46: #{tpu_custom_call.1} parent=11 // pred_check_branch
          %516 = sbr.rel (%p514) target = $region48
        $region47: #{tpu_custom_call.1} parent=11 // pred_region
          _
        $region48: #{tpu_custom_call.1} parent=11 // pred_fallthru
          _
        // Predicated region
        $region49: #{tpu_custom_call.1} parent=11 // pred_check
          %p517 = pneg %p279
        $region50: #{tpu_custom_call.1} parent=11 // pred_check_branch
          %519 = sbr.rel (%p517) target = $region52
        $region51: #{tpu_custom_call.1} parent=11 // pred_region
          %s521 = ssub.s32 16, 16
          %522 = vsyncadd [#allocation14], %s521
          %s524 = sshll.u32 [#allocation13], 4
          %s525 = int_to_ptr.vmem [resolvable:$true] %s524
          %527 = dma.hbm_to_vmem [thread:$0]  %s10, 16, %s525, [#allocation14]
        $region52: #{tpu_custom_call.1} parent=11 // pred_fallthru
          _
        // Predicated region
        $region53: #{tpu_custom_call.1} parent=11 // pred_check
          %p528 = pneg %p300
        $region54: #{tpu_custom_call.1} parent=11 // pred_check_branch
          %530 = sbr.rel (%p528) target = $region56
        $region55: #{tpu_custom_call.1} parent=11 // pred_region
          %s532 = ssub.s32 16, 16
          %533 = vsyncadd [#allocation14], %s532
          %s535 = sshll.u32 [#allocation15], 4
          %s536 = int_to_ptr.vmem [resolvable:$true] %s535
          %538 = dma.hbm_to_vmem [thread:$0]  %s11, 16, %s536, [#allocation14]
        $region56: #{tpu_custom_call.1} parent=11 // pred_fallthru
          _
        // Predicated region
        $region57: #{tpu_custom_call.1} parent=11 // pred_check
          %p539 = pneg %p321
        $region58: #{tpu_custom_call.1} parent=11 // pred_check_branch
          %541 = sbr.rel (%p539) target = $region60
        $region59: #{tpu_custom_call.1} parent=11 // pred_region
          %s543 = ssub.s32 16, 16
          %544 = vsyncadd [#allocation17], %s543
          %s546 = sshll.u32 [#allocation16], 4
          %s547 = int_to_ptr.vmem [resolvable:$true] %s546
          %549 = dma.hbm_to_vmem [thread:$0]  %s12, 16, %s547, [#allocation17]
        $region60: #{tpu_custom_call.1} parent=11 // pred_fallthru
          _
        // Predicated region
        $region61: #{tpu_custom_call.1} parent=11 // pred_check
          %p550 = pneg %p342
        $region62: #{tpu_custom_call.1} parent=11 // pred_check_branch
          %552 = sbr.rel (%p550) target = $region64
        $region63: #{tpu_custom_call.1} parent=11 // pred_region
          _
        $region64: #{tpu_custom_call.1} parent=11 // pred_fallthru
          _
        // Predicated region
        $region65: #{tpu_custom_call.1} parent=11 // pred_check
          %p553 = pneg %p363
        $region66: #{tpu_custom_call.1} parent=11 // pred_check_branch
          %555 = sbr.rel (%p553) target = $region68
        $region67: #{tpu_custom_call.1} parent=11 // pred_region
          _
        $region68: #{tpu_custom_call.1} parent=11 // pred_fallthru
          _
        // Predicated region
        $region69: #{tpu_custom_call.1} parent=11 // pred_check
          %p556 = pneg %p384
        $region70: #{tpu_custom_call.1} parent=11 // pred_check_branch
          %558 = sbr.rel (%p556) target = $region72
        $region71: #{tpu_custom_call.1} parent=11 // pred_region
          _
        $region72: #{tpu_custom_call.1} parent=11 // pred_fallthru
          _
        // Predicated region
        $region73: #{tpu_custom_call.1} parent=11 // pred_check
          %p559 = pneg %p405
        $region74: #{tpu_custom_call.1} parent=11 // pred_check_branch
          %561 = sbr.rel (%p559) target = $region76
        $region75: #{tpu_custom_call.1} parent=11 // pred_region
          _
        $region76: #{tpu_custom_call.1} parent=11 // pred_fallthru
          _
      $region12: #{tpu_custom_call.1} parent=5 // pred_fallthru
        _
      %p562 = scmp.lt.s32.totalorder %s31, 2
      // Predicated region
      $region77: #{tpu_custom_call.1} parent=5 // pred_check
        %p563 = pneg %p562
      $region78: #{tpu_custom_call.1} parent=5 // pred_check_branch
        %565 = sbr.rel (%p563) target = $region80
      $region79: #{tpu_custom_call.1} parent=5 // pred_region
        // Predicated region
        $region81: #{tpu_custom_call.1} parent=79 // pred_check
          %p566 = pneg %p63
        $region82: #{tpu_custom_call.1} parent=79 // pred_check_branch
          %568 = sbr.rel (%p566) target = $region84
        $region83: #{tpu_custom_call.1} parent=79 // pred_region
          %p569 = scmp.lt.s32.totalorder %s38, 1
          %s570 = scalar_select %p569, %s38, 1
          %s571 = smul.addr %s570, 8
          %s572 = scalar_lea.vmem %s0, %s571
        $region84: #{tpu_custom_call.1} parent=79 // pred_fallthru
          _
      $region80: #{tpu_custom_call.1} parent=5 // pred_fallthru
        _
      %p573 = scmp.le.s32.totalorder 1, %s31
      %p574 = scmp.lt.s32.totalorder %s31, 3
      %p575 = pnand %p573, %p574
      %p576 = pneg %p575
      // Predicated region
      $region85: #{tpu_custom_call.1} parent=5 // pred_check
        _
      $region86: #{tpu_custom_call.1} parent=5 // pred_check_branch
        %578 = sbr.rel (%p575) target = $region88
      $region87: #{tpu_custom_call.1} parent=5 // pred_region
        %s579 = ssub.s32 %s31, 1
        // Predicated region
        $region89: #{tpu_custom_call.1} parent=87 // pred_check
          %p580 = pneg %p111
        $region90: #{tpu_custom_call.1} parent=87 // pred_check_branch
          %582 = sbr.rel (%p580) target = $region92
        $region91: #{tpu_custom_call.1} parent=87 // pred_region
          %583 = dma.done [#allocation5], 16
        $region92: #{tpu_custom_call.1} parent=87 // pred_fallthru
          _
        // Predicated region
        $region93: #{tpu_custom_call.1} parent=87 // pred_check
          %p584 = pneg %p153
        $region94: #{tpu_custom_call.1} parent=87 // pred_check_branch
          %586 = sbr.rel (%p584) target = $region96
        $region95: #{tpu_custom_call.1} parent=87 // pred_region
          %587 = dma.done [#allocation8], 16
        $region96: #{tpu_custom_call.1} parent=87 // pred_fallthru
          _
        // Predicated region
        $region97: #{tpu_custom_call.1} parent=87 // pred_check
          %p588 = pneg %p195
        $region98: #{tpu_custom_call.1} parent=87 // pred_check_branch
          %590 = sbr.rel (%p588) target = $region100
        $region99: #{tpu_custom_call.1} parent=87 // pred_region
          %591 = dma.done [#allocation8], 16
        $region100: #{tpu_custom_call.1} parent=87 // pred_fallthru
          _
        // Predicated region
        $region101: #{tpu_custom_call.1} parent=87 // pred_check
          %p592 = pneg %p216
        $region102: #{tpu_custom_call.1} parent=87 // pred_check_branch
          %594 = sbr.rel (%p592) target = $region104
        $region103: #{tpu_custom_call.1} parent=87 // pred_region
          %595 = dma.done [#allocation11], 256
        $region104: #{tpu_custom_call.1} parent=87 // pred_fallthru
          _
        // Predicated region
        $region105: #{tpu_custom_call.1} parent=87 // pred_check
          %p596 = pneg %p237
        $region106: #{tpu_custom_call.1} parent=87 // pred_check_branch
          %598 = sbr.rel (%p596) target = $region108
        $region107: #{tpu_custom_call.1} parent=87 // pred_region
          %599 = dma.done [#allocation11], 16
        $region108: #{tpu_custom_call.1} parent=87 // pred_fallthru
          _
        // Predicated region
        $region109: #{tpu_custom_call.1} parent=87 // pred_check
          %p600 = pneg %p279
        $region110: #{tpu_custom_call.1} parent=87 // pred_check_branch
          %602 = sbr.rel (%p600) target = $region112
        $region111: #{tpu_custom_call.1} parent=87 // pred_region
          %603 = dma.done [#allocation14], 16
        $region112: #{tpu_custom_call.1} parent=87 // pred_fallthru
          _
        // Predicated region
        $region113: #{tpu_custom_call.1} parent=87 // pred_check
          %p604 = pneg %p300
        $region114: #{tpu_custom_call.1} parent=87 // pred_check_branch
          %606 = sbr.rel (%p604) target = $region116
        $region115: #{tpu_custom_call.1} parent=87 // pred_region
          %607 = dma.done [#allocation14], 16
        $region116: #{tpu_custom_call.1} parent=87 // pred_fallthru
          _
        // Predicated region
        $region117: #{tpu_custom_call.1} parent=87 // pred_check
          %p608 = pneg %p321
        $region118: #{tpu_custom_call.1} parent=87 // pred_check_branch
          %610 = sbr.rel (%p608) target = $region120
        $region119: #{tpu_custom_call.1} parent=87 // pred_region
          %611 = dma.done [#allocation17], 16
        $region120: #{tpu_custom_call.1} parent=87 // pred_fallthru
          _
        %p612 = scmp.lt.s32.totalorder %s40, 1
        %s613 = scalar_select %p612, %s40, 1
        %s614 = smul.addr %s613, 8
        %s615 = scalar_lea.vmem %s0, %s614
        %p616 = pneg %p69
        %p617 = pneg %p66
        %p618 = pneg %p90
        %p619 = pneg %p87
        %p620 = pneg %p111
        %p621 = pneg %p108
        %p622 = pneg %p132
        %p623 = pneg %p129
        %p624 = pneg %p153
        %p625 = pneg %p150
        %p626 = pneg %p174
        %p627 = pneg %p171
        %p628 = pneg %p195
        %p629 = pneg %p192
        %p630 = pneg %p216
        %p631 = pneg %p213
        %p632 = pneg %p237
        %p633 = pneg %p234
        %p634 = pneg %p258
        %p635 = pneg %p255
        %p636 = pneg %p279
        %p637 = pneg %p276
        %p638 = pneg %p300
        %p639 = pneg %p297
        %p640 = pneg %p321
        %p641 = pneg %p318
        %p642 = pneg %p342
        %p643 = pneg %p339
        %p644 = pneg %p363
        %p645 = pneg %p360
        %p646 = pneg %p384
        %p647 = pneg %p381
        %p648 = pneg %p405
        %p649 = pneg %p402
        %p650 = pneg %p433
        %p651 = pneg %p430
        %s652 = sand.u32 %s420, 1
        %s653 = scalar_lea.sflag [#allocation6], %s652
        %s654 = sand.u32 %s420, 1
        %s655 = smul.addr %s654, 8
        %s656 = scalar_lea.vmem [#allocation18], %s655
        %p657 = scmp.lt.s32.totalorder %s40, 1
        %s658 = scalar_select %p657, %s40, 1
        %s659 = smul.addr %s658, 8
        %s660 = scalar_lea.vmem %s0, %s659
        %p662 = scmp.eq.s32.totalorder %s41, 0
        // Predicated region
        $region121: #{tpu_custom_call.1} parent=87 // pred_check
          %p663 = pneg %p662
        $region122: #{tpu_custom_call.1} parent=87 // pred_check_branch
          %665 = sbr.rel (%p663) target = $region124
        $region123: #{tpu_custom_call.1} parent=87 // pred_region
          %v666 = vld [vmem:[%s660] sm:$0xff]
          %v667 = vld [vmem:[%s1] sm:$0x1]
          %v668 = vld [vmem:[#allocation4] sm:$0x1]
          %vm669 = vcmask 261120
          %v670 = vsel %vm669, %v666, 0.0
          %671 = vadd.xlane.f32.xlu0 %v670
          %v672 = vpop.xlane.xlu0 %671
          %v673 = vrcp.pop 32.0
          %v674 = vmul.f32 %v672, %v673
          %v675 = vsub.f32 %v666, %v674
          %v676 = vmul.f32 %v675, %v675
          %v677 = vsel %vm669, %v676, 0.0
          %678 = vadd.xlane.f32.xlu0 %v677
          %v679 = vpop.xlane.xlu0 %678
          %v680 = vmul.f32 %v679, %v673
          %v681 = vadd.f32 %v680, 1e-05
          %v682 = vrsqrt.pop %v681
          %v683 = vmul.f32 %v675, %v682
          %v685 = vlaneseq
          %v686 = vshrl.u32 %v685, 7
          %v687 = vsub.s32 0, %v686
          %v688 = vrot.slane %v667, %v687
          %v690 = vmul.f32 %v683, %v688
          %v692 = vlaneseq
          %v693 = vshrl.u32 %v692, 7
          %v694 = vsub.s32 0, %v693
          %v695 = vrot.slane %v668, %v694
          %v697 = vadd.f32 %v690, %v695
          %v698 = vpack.c.bf16 %v697, %v697
          %v699 = vld [vmem:[%s5] sm:$0xf]
          %v700 = vld [vmem:[%s5 + $0x4] sm:$0xf]
          %v701 = vld [vmem:[%s5 + $0x8] sm:$0xf]
          %v702 = vld [vmem:[%s5 + $0xc] sm:$0xf]
          %v703 = vld [vmem:[#allocation9] sm:$0x1]
          %v705 = vlaneseq
          %v706 = vshrl.u32 %v705, 7
          %v707 = vsub.s32 0, %v706
          %v708 = vrot.slane %v703, %v707
          %v714 = vunpack.c.l.b16 %v699
          %v715 = vunpack.c.l.b16 %v700
          %v716 = vunpack.c.l.b16 %v701
          %v717 = vunpack.c.l.b16 %v702
          %v718 = vpack.c.b16 %v715, %v714
          %v719 = vpack.c.b16 %v717, %v716
          %v723 = vsel %vm669, %v698, 0
          %725 = vmatprep.subr.bf16.mxu0 0
          %726 = vmatpush1.bf16.msra.mxu0 %v718
          %727 = vmatprep.subr.bf16.mxu0 0
          %728 = vmatpush1.bf16.msra.mxu0 %v719
          %729 = vmatprep.subr.bf16.mxu0 0
          %730 = vmatpush1.bf16.msra.mxu0 0
          %731 = vmatprep.subr.bf16.mxu0 0
          %732 = vmatpush1.bf16.msra.mxu0 0
          %733 = vmatprep.subr.bf16.mxu0 0
          %734 = vmatpush1.bf16.msra.mxu0 0
          %735 = vmatprep.subr.bf16.mxu0 0
          %736 = vmatpush1.bf16.msra.mxu0 0
          %737 = vmatprep.subr.bf16.mxu0 0
          %738 = vmatpush1.bf16.msra.mxu0 0
          %739 = vmatprep.subr.bf16.mxu0 0
          %740 = vmatpush1.bf16.msra.mxu0 0
          %741 = vmatprep.subr.bf16.mxu0 0
          %742 = vmatpush1.bf16.msra.mxu0 0
          %743 = vmatprep.subr.bf16.mxu0 0
          %744 = vmatpush1.bf16.msra.mxu0 0
          %745 = vmatprep.subr.bf16.mxu0 0
          %746 = vmatpush1.bf16.msra.mxu0 0
          %747 = vmatprep.subr.bf16.mxu0 0
          %748 = vmatpush1.bf16.msra.mxu0 0
          %749 = vmatprep.subr.bf16.mxu0 0
          %750 = vmatpush1.bf16.msra.mxu0 0
          %751 = vmatprep.subr.bf16.mxu0 0
          %752 = vmatpush1.bf16.msra.mxu0 0
          %753 = vmatprep.subr.bf16.mxu0 0
          %754 = vmatpush1.bf16.msra.mxu0 0
          %755 = vmatprep.subr.bf16.mxu0 0
          %756 = vmatpush1.bf16.msra.mxu0 0
          %757 = vmatprep.mubr.bf16.mxu0 0
          %758 = vmatmul.mubr.bf16.gmra.mrb[0].mxu0 %v723
          %v759 = vpop.f32.mrb[0].mxu0
          %v760 = vadd.f32 %v708, %v759
          %v761 = vpop.f32.mrb[0].mxu0
          %v762 = vpop.f32.mrb[0].mxu0
          %v763 = vpop.f32.mrb[0].mxu0
          %764 = vdwg.mxu0
          %v765 = vld [vmem:[#allocation10] sm:$0xf]
          %v766 = vld [vmem:[#allocation10 + $0x4] sm:$0xf]
          %v767 = vld [vmem:[#allocation10 + $0x8] sm:$0xf]
          %v768 = vld [vmem:[#allocation10 + $0xc] sm:$0xf]
          %v769 = vld [vmem:[#allocation12] sm:$0x1]
          %v771 = vlaneseq
          %v772 = vshrl.u32 %v771, 7
          %v773 = vsub.s32 0, %v772
          %v774 = vrot.slane %v769, %v773
          %v780 = vunpack.c.l.b16 %v765
          %v781 = vunpack.c.l.b16 %v766
          %v782 = vunpack.c.l.b16 %v767
          %v783 = vunpack.c.l.b16 %v768
          %v784 = vpack.c.b16 %v781, %v780
          %v785 = vpack.c.b16 %v783, %v782
          %788 = vmatprep.subr.bf16.mxu0 0
          %789 = vmatpush1.bf16.msra.mxu0 %v784
          %790 = vmatprep.subr.bf16.mxu0 0
          %791 = vmatpush1.bf16.msra.mxu0 %v785
          %792 = vmatprep.subr.bf16.mxu0 0
          %793 = vmatpush1.bf16.msra.mxu0 0
          %794 = vmatprep.subr.bf16.mxu0 0
          %795 = vmatpush1.bf16.msra.mxu0 0
          %796 = vmatprep.subr.bf16.mxu0 0
          %797 = vmatpush1.bf16.msra.mxu0 0
          %798 = vmatprep.subr.bf16.mxu0 0
          %799 = vmatpush1.bf16.msra.mxu0 0
          %800 = vmatprep.subr.bf16.mxu0 0
          %801 = vmatpush1.bf16.msra.mxu0 0
          %802 = vmatprep.subr.bf16.mxu0 0
          %803 = vmatpush1.bf16.msra.mxu0 0
          %804 = vmatprep.subr.bf16.mxu0 0
          %805 = vmatpush1.bf16.msra.mxu0 0
          %806 = vmatprep.subr.bf16.mxu0 0
          %807 = vmatpush1.bf16.msra.mxu0 0
          %808 = vmatprep.subr.bf16.mxu0 0
          %809 = vmatpush1.bf16.msra.mxu0 0
          %810 = vmatprep.subr.bf16.mxu0 0
          %811 = vmatpush1.bf16.msra.mxu0 0
          %812 = vmatprep.subr.bf16.mxu0 0
          %813 = vmatpush1.bf16.msra.mxu0 0
          %814 = vmatprep.subr.bf16.mxu0 0
          %815 = vmatpush1.bf16.msra.mxu0 0
          %816 = vmatprep.subr.bf16.mxu0 0
          %817 = vmatpush1.bf16.msra.mxu0 0
          %818 = vmatprep.subr.bf16.mxu0 0
          %819 = vmatpush1.bf16.msra.mxu0 0
          %820 = vmatprep.mubr.bf16.mxu0 0
          %821 = vmatmul.mubr.bf16.gmra.mrb[0].mxu0 %v723
          %v822 = vpop.f32.mrb[0].mxu0
          %v823 = vadd.f32 %v774, %v822
          %v824 = vpop.f32.mrb[0].mxu0
          %v825 = vpop.f32.mrb[0].mxu0
          %v826 = vpop.f32.mrb[0].mxu0
          %827 = vdwg.mxu0
          %829 = vrot.lane.b32.xlu0 %v760, 120
          %v830 = vpop.permute.xlu0 %829
          %832 = vrot.lane.b32.xlu0 %v760, 112
          %v833 = vpop.permute.xlu0 %832
          %835 = vrot.lane.b32.xlu0 %v760, 104
          %v836 = vpop.permute.xlu0 %835
          %v838 = vcombine.low %v760, %v833
          %v839 = vcombine.high %v760, %v833
          %v841 = vunpack.c.l.s4 1983009808
          %v842 = vunpack.c.0.s8 %v841
          %v843 = vlaneseq
          %v844 = vshrl.u32 %v843, 7
          %v845 = vsub.s32 %v842, %v844
          %v846 = vrot.slane %v838, %v845
          %v848 = vunpack.c.l.s4 1983009808
          %v849 = vunpack.c.0.s8 %v848
          %v850 = vlaneseq
          %v851 = vshrl.u32 %v850, 7
          %v852 = vsub.s32 %v849, %v851
          %v853 = vrot.slane %v839, %v852
          %v854 = vcombine.low %v830, %v836
          %v855 = vcombine.high %v830, %v836
          %v857 = vunpack.c.l.s4 1983009808
          %v858 = vunpack.c.0.s8 %v857
          %v859 = vlaneseq
          %v860 = vshrl.u32 %v859, 7
          %v861 = vsub.s32 %v858, %v860
          %v862 = vrot.slane %v854, %v861
          %v864 = vunpack.c.l.s4 1983009808
          %v865 = vunpack.c.0.s8 %v864
          %v866 = vlaneseq
          %v867 = vshrl.u32 %v866, 7
          %v868 = vsub.s32 %v865, %v867
          %v869 = vrot.slane %v855, %v868
          %v870 = vcombine.low %v846, %v862
          %v871 = vcombine.high %v846, %v862
          %v873 = vunpack.c.l.s4 1934713408
          %v874 = vunpack.c.0.s8 %v873
          %v875 = vlaneseq
          %v876 = vshrl.u32 %v875, 7
          %v877 = vsub.s32 %v874, %v876
          %v878 = vrot.slane %v870, %v877
          %v880 = vunpack.c.l.s4 1934713408
          %v881 = vunpack.c.0.s8 %v880
          %v882 = vlaneseq
          %v883 = vshrl.u32 %v882, 7
          %v884 = vsub.s32 %v881, %v883
          %v885 = vrot.slane %v871, %v884
          %v886 = vcombine.low %v853, %v869
          %v887 = vcombine.high %v853, %v869
          %v889 = vunpack.c.l.s4 1934713408
          %v890 = vunpack.c.0.s8 %v889
          %v891 = vlaneseq
          %v892 = vshrl.u32 %v891, 7
          %v893 = vsub.s32 %v890, %v892
          %v894 = vrot.slane %v886, %v893
          %v896 = vunpack.c.l.s4 1934713408
          %v897 = vunpack.c.0.s8 %v896
          %v898 = vlaneseq
          %v899 = vshrl.u32 %v898, 7
          %v900 = vsub.s32 %v897, %v899
          %v901 = vrot.slane %v887, %v900
          %v902 = vcombine.high %v878, 0.0
          %v903 = vcombine.high %v885, 0.0
          %v904 = vcombine.high %v894, 0.0
          %v905 = vcombine.high %v901, 0.0
          %v906 = vcombine.low %v878, %v885
          %v908 = vunpack.c.l.s4 1983009808
          %v909 = vunpack.c.0.s8 %v908
          %v910 = vlaneseq
          %v911 = vshrl.u32 %v910, 7
          %v912 = vsub.s32 %v909, %v911
          %v913 = vrot.slane %v906, %v912
          %v914 = vcombine.low %v902, %v903
          %v916 = vunpack.c.l.s4 1983009808
          %v917 = vunpack.c.0.s8 %v916
          %v918 = vlaneseq
          %v919 = vshrl.u32 %v918, 7
          %v920 = vsub.s32 %v917, %v919
          %v921 = vrot.slane %v914, %v920
          %v922 = vcombine.low %v894, %v901
          %v924 = vunpack.c.l.s4 1983009808
          %v925 = vunpack.c.0.s8 %v924
          %v926 = vlaneseq
          %v927 = vshrl.u32 %v926, 7
          %v928 = vsub.s32 %v925, %v927
          %v929 = vrot.slane %v922, %v928
          %v930 = vcombine.low %v904, %v905
          %v932 = vunpack.c.l.s4 1983009808
          %v933 = vunpack.c.0.s8 %v932
          %v934 = vlaneseq
          %v935 = vshrl.u32 %v934, 7
          %v936 = vsub.s32 %v933, %v935
          %v937 = vrot.slane %v930, %v936
          %v938 = vcombine.low %v913, %v921
          %v939 = vcombine.high %v913, %v921
          %v941 = vunpack.c.l.s4 1934713408
          %v942 = vunpack.c.0.s8 %v941
          %v943 = vlaneseq
          %v944 = vshrl.u32 %v943, 7
          %v945 = vsub.s32 %v942, %v944
          %v946 = vrot.slane %v938, %v945
          %v948 = vunpack.c.l.s4 1934713408
          %v949 = vunpack.c.0.s8 %v948
          %v950 = vlaneseq
          %v951 = vshrl.u32 %v950, 7
          %v952 = vsub.s32 %v949, %v951
          %v953 = vrot.slane %v939, %v952
          %v954 = vcombine.low %v929, %v937
          %v955 = vcombine.high %v929, %v937
          %v957 = vunpack.c.l.s4 1934713408
          %v958 = vunpack.c.0.s8 %v957
          %v959 = vlaneseq
          %v960 = vshrl.u32 %v959, 7
          %v961 = vsub.s32 %v958, %v960
          %v962 = vrot.slane %v954, %v961
          %v964 = vunpack.c.l.s4 1934713408
          %v965 = vunpack.c.0.s8 %v964
          %v966 = vlaneseq
          %v967 = vshrl.u32 %v966, 7
          %v968 = vsub.s32 %v965, %v967
          %v969 = vrot.slane %v955, %v968
          %v970 = vcombine.low %v946, %v962
          %v971 = vcombine.high %v946, %v962
          %v972 = vcombine.low %v953, %v969
          %v973 = vcombine.high %v953, %v969
          %v974 = vpack.c.bf16 %v970, %v970
          %v975 = vpack.c.bf16 %v971, %v971
          %v976 = vpack.c.bf16 %v972, %v972
          %v977 = vpack.c.bf16 %v973, %v973
          %vm978 = vcmask 60416
          %979 = vst.msk [vmem:[#allocation2] sm:$0xf] %vm978, %v974
          %980 = vst.msk [vmem:[#allocation2 + $0x4] sm:$0xf] %vm978, %v975
          %981 = vst.msk [vmem:[#allocation2 + $0x8] sm:$0xf] %vm978, %v976
          %982 = vst.msk [vmem:[#allocation2 + $0xc] sm:$0xf] %vm978, %v977
          %984 = vrot.lane.b32.xlu0 %v823, 120
          %v985 = vpop.permute.xlu0 %984
          %987 = vrot.lane.b32.xlu0 %v823, 112
          %v988 = vpop.permute.xlu0 %987
          %990 = vrot.lane.b32.xlu0 %v823, 104
          %v991 = vpop.permute.xlu0 %990
          %v993 = vcombine.low %v823, %v988
          %v994 = vcombine.high %v823, %v988
          %v996 = vunpack.c.l.s4 1983009808
          %v997 = vunpack.c.0.s8 %v996
          %v998 = vlaneseq
          %v999 = vshrl.u32 %v998, 7
          %v1000 = vsub.s32 %v997, %v999
          %v1001 = vrot.slane %v993, %v1000
          %v1003 = vunpack.c.l.s4 1983009808
          %v1004 = vunpack.c.0.s8 %v1003
          %v1005 = vlaneseq
          %v1006 = vshrl.u32 %v1005, 7
          %v1007 = vsub.s32 %v1004, %v1006
          %v1008 = vrot.slane %v994, %v1007
          %v1009 = vcombine.low %v985, %v991
          %v1010 = vcombine.high %v985, %v991
          %v1012 = vunpack.c.l.s4 1983009808
          %v1013 = vunpack.c.0.s8 %v1012
          %v1014 = vlaneseq
          %v1015 = vshrl.u32 %v1014, 7
          %v1016 = vsub.s32 %v1013, %v1015
          %v1017 = vrot.slane %v1009, %v1016
          %v1019 = vunpack.c.l.s4 1983009808
          %v1020 = vunpack.c.0.s8 %v1019
          %v1021 = vlaneseq
          %v1022 = vshrl.u32 %v1021, 7
          %v1023 = vsub.s32 %v1020, %v1022
          %v1024 = vrot.slane %v1010, %v1023
          %v1025 = vcombine.low %v1001, %v1017
          %v1026 = vcombine.high %v1001, %v1017
          %v1028 = vunpack.c.l.s4 1934713408
          %v1029 = vunpack.c.0.s8 %v1028
          %v1030 = vlaneseq
          %v1031 = vshrl.u32 %v1030, 7
          %v1032 = vsub.s32 %v1029, %v1031
          %v1033 = vrot.slane %v1025, %v1032
          %v1035 = vunpack.c.l.s4 1934713408
          %v1036 = vunpack.c.0.s8 %v1035
          %v1037 = vlaneseq
          %v1038 = vshrl.u32 %v1037, 7
          %v1039 = vsub.s32 %v1036, %v1038
          %v1040 = vrot.slane %v1026, %v1039
          %v1041 = vcombine.low %v1008, %v1024
          %v1042 = vcombine.high %v1008, %v1024
          %v1044 = vunpack.c.l.s4 1934713408
          %v1045 = vunpack.c.0.s8 %v1044
          %v1046 = vlaneseq
          %v1047 = vshrl.u32 %v1046, 7
          %v1048 = vsub.s32 %v1045, %v1047
          %v1049 = vrot.slane %v1041, %v1048
          %v1051 = vunpack.c.l.s4 1934713408
          %v1052 = vunpack.c.0.s8 %v1051
          %v1053 = vlaneseq
          %v1054 = vshrl.u32 %v1053, 7
          %v1055 = vsub.s32 %v1052, %v1054
          %v1056 = vrot.slane %v1042, %v1055
          %v1057 = vcombine.high %v1033, 0.0
          %v1058 = vcombine.high %v1040, 0.0
          %v1059 = vcombine.high %v1049, 0.0
          %v1060 = vcombine.high %v1056, 0.0
          %v1061 = vcombine.low %v1033, %v1040
          %v1063 = vunpack.c.l.s4 1983009808
          %v1064 = vunpack.c.0.s8 %v1063
          %v1065 = vlaneseq
          %v1066 = vshrl.u32 %v1065, 7
          %v1067 = vsub.s32 %v1064, %v1066
          %v1068 = vrot.slane %v1061, %v1067
          %v1069 = vcombine.low %v1057, %v1058
          %v1071 = vunpack.c.l.s4 1983009808
          %v1072 = vunpack.c.0.s8 %v1071
          %v1073 = vlaneseq
          %v1074 = vshrl.u32 %v1073, 7
          %v1075 = vsub.s32 %v1072, %v1074
          %v1076 = vrot.slane %v1069, %v1075
          %v1077 = vcombine.low %v1049, %v1056
          %v1079 = vunpack.c.l.s4 1983009808
          %v1080 = vunpack.c.0.s8 %v1079
          %v1081 = vlaneseq
          %v1082 = vshrl.u32 %v1081, 7
          %v1083 = vsub.s32 %v1080, %v1082
          %v1084 = vrot.slane %v1077, %v1083
          %v1085 = vcombine.low %v1059, %v1060
          %v1087 = vunpack.c.l.s4 1983009808
          %v1088 = vunpack.c.0.s8 %v1087
          %v1089 = vlaneseq
          %v1090 = vshrl.u32 %v1089, 7
          %v1091 = vsub.s32 %v1088, %v1090
          %v1092 = vrot.slane %v1085, %v1091
          %v1093 = vcombine.low %v1068, %v1076
          %v1094 = vcombine.high %v1068, %v1076
          %v1096 = vunpack.c.l.s4 1934713408
          %v1097 = vunpack.c.0.s8 %v1096
          %v1098 = vlaneseq
          %v1099 = vshrl.u32 %v1098, 7
          %v1100 = vsub.s32 %v1097, %v1099
          %v1101 = vrot.slane %v1093, %v1100
          %v1103 = vunpack.c.l.s4 1934713408
          %v1104 = vunpack.c.0.s8 %v1103
          %v1105 = vlaneseq
          %v1106 = vshrl.u32 %v1105, 7
          %v1107 = vsub.s32 %v1104, %v1106
          %v1108 = vrot.slane %v1094, %v1107
          %v1109 = vcombine.low %v1084, %v1092
          %v1110 = vcombine.high %v1084, %v1092
          %v1112 = vunpack.c.l.s4 1934713408
          %v1113 = vunpack.c.0.s8 %v1112
          %v1114 = vlaneseq
          %v1115 = vshrl.u32 %v1114, 7
          %v1116 = vsub.s32 %v1113, %v1115
          %v1117 = vrot.slane %v1109, %v1116
          %v1119 = vunpack.c.l.s4 1934713408
          %v1120 = vunpack.c.0.s8 %v1119
          %v1121 = vlaneseq
          %v1122 = vshrl.u32 %v1121, 7
          %v1123 = vsub.s32 %v1120, %v1122
          %v1124 = vrot.slane %v1110, %v1123
          %v1125 = vcombine.low %v1101, %v1117
          %v1126 = vcombine.high %v1101, %v1117
          %v1127 = vcombine.low %v1108, %v1124
          %v1128 = vcombine.high %v1108, %v1124
          %v1129 = vpack.c.bf16 %v1125, %v1125
          %v1130 = vpack.c.bf16 %v1126, %v1126
          %v1131 = vpack.c.bf16 %v1127, %v1127
          %v1132 = vpack.c.bf16 %v1128, %v1128
          %1133 = vst.msk [vmem:[#allocation3] sm:$0xf] %vm978, %v1129
          %1134 = vst.msk [vmem:[#allocation3 + $0x4] sm:$0xf] %vm978, %v1130
          %1135 = vst.msk [vmem:[#allocation3 + $0x8] sm:$0xf] %vm978, %v1131
          %1136 = vst.msk [vmem:[#allocation3 + $0xc] sm:$0xf] %vm978, %v1132
        $region124: #{tpu_custom_call.1} parent=87 // pred_fallthru
          _
        %s1137 = smul.u32 %s41, 8
        %s1138 = scalar_lea.vmem %s660, %s1137
        %v1139 = vld [vmem:[%s1138] sm:$0xff]
        %v1140 = vld [vmem:[%s1] sm:$0x1]
        %v1141 = vld [vmem:[#allocation4] sm:$0x1]
        %vm1142 = vcmask 261120
        %v1143 = vsel %vm1142, %v1139, 0.0
        %1144 = vadd.xlane.f32.xlu0 %v1143
        %v1145 = vpop.xlane.xlu0 %1144
        %v1146 = vrcp.pop 32.0
        %v1147 = vmul.f32 %v1145, %v1146
        %v1148 = vsub.f32 %v1139, %v1147
        %v1149 = vmul.f32 %v1148, %v1148
        %v1150 = vsel %vm1142, %v1149, 0.0
        %1151 = vadd.xlane.f32.xlu0 %v1150
        %v1152 = vpop.xlane.xlu0 %1151
        %v1153 = vmul.f32 %v1152, %v1146
        %v1154 = vadd.f32 %v1153, 1e-05
        %v1155 = vrsqrt.pop %v1154
        %v1156 = vmul.f32 %v1148, %v1155
        %v1158 = vlaneseq
        %v1159 = vshrl.u32 %v1158, 7
        %v1160 = vsub.s32 0, %v1159
        %v1161 = vrot.slane %v1140, %v1160
        %v1163 = vmul.f32 %v1156, %v1161
        %v1165 = vlaneseq
        %v1166 = vshrl.u32 %v1165, 7
        %v1167 = vsub.s32 0, %v1166
        %v1168 = vrot.slane %v1141, %v1167
        %v1170 = vadd.f32 %v1163, %v1168
        %v1171 = vpack.c.bf16 %v1170, %v1170
        %v1172 = vld [vmem:[%s3] sm:$0xf]
        %v1173 = vld [vmem:[%s3 + $0x4] sm:$0xf]
        %v1174 = vld [vmem:[%s3 + $0x8] sm:$0xf]
        %v1175 = vld [vmem:[%s3 + $0xc] sm:$0xf]
        %v1176 = vld [vmem:[#allocation7] sm:$0x1]
        %v1178 = vlaneseq
        %v1179 = vshrl.u32 %v1178, 7
        %v1180 = vsub.s32 0, %v1179
        %v1181 = vrot.slane %v1176, %v1180
        %v1187 = vunpack.c.l.b16 %v1172
        %v1188 = vunpack.c.l.b16 %v1173
        %v1189 = vunpack.c.l.b16 %v1174
        %v1190 = vunpack.c.l.b16 %v1175
        %v1191 = vpack.c.b16 %v1188, %v1187
        %v1192 = vpack.c.b16 %v1190, %v1189
        %v1196 = vsel %vm1142, %v1171, 0
        %1198 = vmatprep.subr.bf16.mxu0 0
        %1199 = vmatpush1.bf16.msra.mxu0 %v1191
        %1200 = vmatprep.subr.bf16.mxu0 0
        %1201 = vmatpush1.bf16.msra.mxu0 %v1192
        %1202 = vmatprep.subr.bf16.mxu0 0
        %1203 = vmatpush1.bf16.msra.mxu0 0
        %1204 = vmatprep.subr.bf16.mxu0 0
        %1205 = vmatpush1.bf16.msra.mxu0 0
        %1206 = vmatprep.subr.bf16.mxu0 0
        %1207 = vmatpush1.bf16.msra.mxu0 0
        %1208 = vmatprep.subr.bf16.mxu0 0
        %1209 = vmatpush1.bf16.msra.mxu0 0
        %1210 = vmatprep.subr.bf16.mxu0 0
        %1211 = vmatpush1.bf16.msra.mxu0 0
        %1212 = vmatprep.subr.bf16.mxu0 0
        %1213 = vmatpush1.bf16.msra.mxu0 0
        %1214 = vmatprep.subr.bf16.mxu0 0
        %1215 = vmatpush1.bf16.msra.mxu0 0
        %1216 = vmatprep.subr.bf16.mxu0 0
        %1217 = vmatpush1.bf16.msra.mxu0 0
        %1218 = vmatprep.subr.bf16.mxu0 0
        %1219 = vmatpush1.bf16.msra.mxu0 0
        %1220 = vmatprep.subr.bf16.mxu0 0
        %1221 = vmatpush1.bf16.msra.mxu0 0
        %1222 = vmatprep.subr.bf16.mxu0 0
        %1223 = vmatpush1.bf16.msra.mxu0 0
        %1224 = vmatprep.subr.bf16.mxu0 0
        %1225 = vmatpush1.bf16.msra.mxu0 0
        %1226 = vmatprep.subr.bf16.mxu0 0
        %1227 = vmatpush1.bf16.msra.mxu0 0
        %1228 = vmatprep.subr.bf16.mxu0 0
        %1229 = vmatpush1.bf16.msra.mxu0 0
        %1230 = vmatprep.mubr.bf16.mxu0 0
        %1231 = vmatmul.mubr.bf16.gmra.mrb[0].mxu0 %v1196
        %v1232 = vpop.f32.mrb[0].mxu0
        %v1233 = vadd.f32 %v1181, %v1232
        %v1234 = vpop.f32.mrb[0].mxu0
        %v1235 = vpop.f32.mrb[0].mxu0
        %v1236 = vpop.f32.mrb[0].mxu0
        %1237 = vdwg.mxu0
        %1239 = vrot.lane.b32.xlu0 %v1233, 120
        %v1240 = vpop.permute.xlu0 %1239
        %1242 = vrot.lane.b32.xlu0 %v1233, 112
        %v1243 = vpop.permute.xlu0 %1242
        %1245 = vrot.lane.b32.xlu0 %v1233, 104
        %v1246 = vpop.permute.xlu0 %1245
        %v1248 = vcombine.low %v1233, %v1243
        %v1249 = vcombine.high %v1233, %v1243
        %v1251 = vunpack.c.l.s4 1983009808
        %v1252 = vunpack.c.0.s8 %v1251
        %v1253 = vlaneseq
        %v1254 = vshrl.u32 %v1253, 7
        %v1255 = vsub.s32 %v1252, %v1254
        %v1256 = vrot.slane %v1248, %v1255
        %v1258 = vunpack.c.l.s4 1983009808
        %v1259 = vunpack.c.0.s8 %v1258
        %v1260 = vlaneseq
        %v1261 = vshrl.u32 %v1260, 7
        %v1262 = vsub.s32 %v1259, %v1261
        %v1263 = vrot.slane %v1249, %v1262
        %v1264 = vcombine.low %v1240, %v1246
        %v1265 = vcombine.high %v1240, %v1246
        %v1267 = vunpack.c.l.s4 1983009808
        %v1268 = vunpack.c.0.s8 %v1267
        %v1269 = vlaneseq
        %v1270 = vshrl.u32 %v1269, 7
        %v1271 = vsub.s32 %v1268, %v1270
        %v1272 = vrot.slane %v1264, %v1271
        %v1274 = vunpack.c.l.s4 1983009808
        %v1275 = vunpack.c.0.s8 %v1274
        %v1276 = vlaneseq
        %v1277 = vshrl.u32 %v1276, 7
        %v1278 = vsub.s32 %v1275, %v1277
        %v1279 = vrot.slane %v1265, %v1278
        %v1280 = vcombine.low %v1256, %v1272
        %v1281 = vcombine.high %v1256, %v1272
        %v1283 = vunpack.c.l.s4 1934713408
        %v1284 = vunpack.c.0.s8 %v1283
        %v1285 = vlaneseq
        %v1286 = vshrl.u32 %v1285, 7
        %v1287 = vsub.s32 %v1284, %v1286
        %v1288 = vrot.slane %v1280, %v1287
        %v1290 = vunpack.c.l.s4 1934713408
        %v1291 = vunpack.c.0.s8 %v1290
        %v1292 = vlaneseq
        %v1293 = vshrl.u32 %v1292, 7
        %v1294 = vsub.s32 %v1291, %v1293
        %v1295 = vrot.slane %v1281, %v1294
        %v1296 = vcombine.low %v1263, %v1279
        %v1297 = vcombine.high %v1263, %v1279
        %v1299 = vunpack.c.l.s4 1934713408
        %v1300 = vunpack.c.0.s8 %v1299
        %v1301 = vlaneseq
        %v1302 = vshrl.u32 %v1301, 7
        %v1303 = vsub.s32 %v1300, %v1302
        %v1304 = vrot.slane %v1296, %v1303
        %v1306 = vunpack.c.l.s4 1934713408
        %v1307 = vunpack.c.0.s8 %v1306
        %v1308 = vlaneseq
        %v1309 = vshrl.u32 %v1308, 7
        %v1310 = vsub.s32 %v1307, %v1309
        %v1311 = vrot.slane %v1297, %v1310
        %v1312 = vcombine.high %v1288, 0.0
        %v1313 = vcombine.high %v1295, 0.0
        %v1314 = vcombine.high %v1304, 0.0
        %v1315 = vcombine.high %v1311, 0.0
        %v1316 = vcombine.low %v1288, %v1295
        %v1318 = vunpack.c.l.s4 1983009808
        %v1319 = vunpack.c.0.s8 %v1318
        %v1320 = vlaneseq
        %v1321 = vshrl.u32 %v1320, 7
        %v1322 = vsub.s32 %v1319, %v1321
        %v1323 = vrot.slane %v1316, %v1322
        %v1324 = vcombine.low %v1312, %v1313
        %v1326 = vunpack.c.l.s4 1983009808
        %v1327 = vunpack.c.0.s8 %v1326
        %v1328 = vlaneseq
        %v1329 = vshrl.u32 %v1328, 7
        %v1330 = vsub.s32 %v1327, %v1329
        %v1331 = vrot.slane %v1324, %v1330
        %v1332 = vcombine.low %v1304, %v1311
        %v1334 = vunpack.c.l.s4 1983009808
        %v1335 = vunpack.c.0.s8 %v1334
        %v1336 = vlaneseq
        %v1337 = vshrl.u32 %v1336, 7
        %v1338 = vsub.s32 %v1335, %v1337
        %v1339 = vrot.slane %v1332, %v1338
        %v1340 = vcombine.low %v1314, %v1315
        %v1342 = vunpack.c.l.s4 1983009808
        %v1343 = vunpack.c.0.s8 %v1342
        %v1344 = vlaneseq
        %v1345 = vshrl.u32 %v1344, 7
        %v1346 = vsub.s32 %v1343, %v1345
        %v1347 = vrot.slane %v1340, %v1346
        %v1348 = vcombine.low %v1323, %v1331
        %v1349 = vcombine.high %v1323, %v1331
        %v1351 = vunpack.c.l.s4 1934713408
        %v1352 = vunpack.c.0.s8 %v1351
        %v1353 = vlaneseq
        %v1354 = vshrl.u32 %v1353, 7
        %v1355 = vsub.s32 %v1352, %v1354
        %v1356 = vrot.slane %v1348, %v1355
        %v1358 = vunpack.c.l.s4 1934713408
        %v1359 = vunpack.c.0.s8 %v1358
        %v1360 = vlaneseq
        %v1361 = vshrl.u32 %v1360, 7
        %v1362 = vsub.s32 %v1359, %v1361
        %v1363 = vrot.slane %v1349, %v1362
        %v1364 = vcombine.low %v1339, %v1347
        %v1365 = vcombine.high %v1339, %v1347
        %v1367 = vunpack.c.l.s4 1934713408
        %v1368 = vunpack.c.0.s8 %v1367
        %v1369 = vlaneseq
        %v1370 = vshrl.u32 %v1369, 7
        %v1371 = vsub.s32 %v1368, %v1370
        %v1372 = vrot.slane %v1364, %v1371
        %v1374 = vunpack.c.l.s4 1934713408
        %v1375 = vunpack.c.0.s8 %v1374
        %v1376 = vlaneseq
        %v1377 = vshrl.u32 %v1376, 7
        %v1378 = vsub.s32 %v1375, %v1377
        %v1379 = vrot.slane %v1365, %v1378
        %v1380 = vcombine.low %v1356, %v1372
        %v1381 = vcombine.high %v1356, %v1372
        %v1382 = vcombine.low %v1363, %v1379
        %v1383 = vcombine.high %v1363, %v1379
        %v1384 = vpack.c.bf16 %v1380, %v1380
        %v1385 = vpack.c.bf16 %v1381, %v1381
        %v1386 = vpack.c.bf16 %v1382, %v1382
        %v1387 = vpack.c.bf16 %v1383, %v1383
        %v1388 = vld [vmem:[#allocation2] sm:$0xf]
        %v1389 = vld [vmem:[#allocation2 + $0x4] sm:$0xf]
        %v1390 = vld [vmem:[#allocation2 + $0x8] sm:$0xf]
        %v1391 = vld [vmem:[#allocation2 + $0xc] sm:$0xf]
        %vm1392 = vcmask 64512
        %v1394 = vsel %vm1392, %v1384, 0
        %v1397 = vsel %vm1392, %v1388, 0
        %1399 = vmatprep.subr.bf16.mxu0 0
        %1400 = vmatpush1.bf16.xpose.msra.mxu0 %v1397
        %1401 = vmatprep.subr.bf16.mxu0 0
        %1402 = vmatpush1.bf16.xpose.msra.mxu0 0
        %1403 = vmatprep.subr.bf16.mxu0 0
        %1404 = vmatpush1.bf16.xpose.msra.mxu0 0
        %1405 = vmatprep.subr.bf16.mxu0 0
        %1406 = vmatpush1.bf16.xpose.msra.mxu0 0
        %1407 = vmatprep.subr.bf16.mxu0 0
        %1408 = vmatpush1.bf16.xpose.msra.mxu0 0
        %1409 = vmatprep.subr.bf16.mxu0 0
        %1410 = vmatpush1.bf16.xpose.msra.mxu0 0
        %1411 = vmatprep.subr.bf16.mxu0 0
        %1412 = vmatpush1.bf16.xpose.msra.mxu0 0
        %1413 = vmatprep.subr.bf16.mxu0 0
        %1414 = vmatpush1.bf16.xpose.msra.mxu0 0
        %1415 = vmatprep.subr.bf16.mxu0 0
        %1416 = vmatpush1.bf16.xpose.msra.mxu0 0
        %1417 = vmatprep.subr.bf16.mxu0 0
        %1418 = vmatpush1.bf16.xpose.msra.mxu0 0
        %1419 = vmatprep.subr.bf16.mxu0 0
        %1420 = vmatpush1.bf16.xpose.msra.mxu0 0
        %1421 = vmatprep.subr.bf16.mxu0 0
        %1422 = vmatpush1.bf16.xpose.msra.mxu0 0
        %1423 = vmatprep.subr.bf16.mxu0 0
        %1424 = vmatpush1.bf16.xpose.msra.mxu0 0
        %1425 = vmatprep.subr.bf16.mxu0 0
        %1426 = vmatpush1.bf16.xpose.msra.mxu0 0
        %1427 = vmatprep.subr.bf16.mxu0 0
        %1428 = vmatpush1.bf16.xpose.msra.mxu0 0
        %1429 = vmatprep.subr.bf16.mxu0 0
        %1430 = vmatpush1.bf16.xpose.msra.mxu0 0
        %1431 = vmatprep.mubr.bf16.mxu0 0
        %1432 = vmatmul.mubr.bf16.gmra.mrb[0].mxu0 %v1394
        %v1433 = vpop.f32.mrb[0].mxu0
        %v1434 = vadd.f32 0.0, %v1433
        %v1435 = vpop.f32.mrb[0].mxu0
        %v1436 = vpop.f32.mrb[0].mxu0
        %v1437 = vpop.f32.mrb[0].mxu0
        %1438 = vdwg.mxu0
        %v1440 = vsel %vm1392, %v1385, 0
        %v1443 = vsel %vm1392, %v1389, 0
        %1445 = vmatprep.subr.bf16.mxu0 0
        %1446 = vmatpush1.bf16.xpose.msra.mxu0 %v1443
        %1447 = vmatprep.subr.bf16.mxu0 0
        %1448 = vmatpush1.bf16.xpose.msra.mxu0 0
        %1449 = vmatprep.subr.bf16.mxu0 0
        %1450 = vmatpush1.bf16.xpose.msra.mxu0 0
        %1451 = vmatprep.subr.bf16.mxu0 0
        %1452 = vmatpush1.bf16.xpose.msra.mxu0 0
        %1453 = vmatprep.subr.bf16.mxu0 0
        %1454 = vmatpush1.bf16.xpose.msra.mxu0 0
        %1455 = vmatprep.subr.bf16.mxu0 0
        %1456 = vmatpush1.bf16.xpose.msra.mxu0 0
        %1457 = vmatprep.subr.bf16.mxu0 0
        %1458 = vmatpush1.bf16.xpose.msra.mxu0 0
        %1459 = vmatprep.subr.bf16.mxu0 0
        %1460 = vmatpush1.bf16.xpose.msra.mxu0 0
        %1461 = vmatprep.subr.bf16.mxu0 0
        %1462 = vmatpush1.bf16.xpose.msra.mxu0 0
        %1463 = vmatprep.subr.bf16.mxu0 0
        %1464 = vmatpush1.bf16.xpose.msra.mxu0 0
        %1465 = vmatprep.subr.bf16.mxu0 0
        %1466 = vmatpush1.bf16.xpose.msra.mxu0 0
        %1467 = vmatprep.subr.bf16.mxu0 0
        %1468 = vmatpush1.bf16.xpose.msra.mxu0 0
        %1469 = vmatprep.subr.bf16.mxu0 0
        %1470 = vmatpush1.bf16.xpose.msra.mxu0 0
        %1471 = vmatprep.subr.bf16.mxu0 0
        %1472 = vmatpush1.bf16.xpose.msra.mxu0 0
        %1473 = vmatprep.subr.bf16.mxu0 0
        %1474 = vmatpush1.bf16.xpose.msra.mxu0 0
        %1475 = vmatprep.subr.bf16.mxu0 0
        %1476 = vmatpush1.bf16.xpose.msra.mxu0 0
        %1477 = vmatprep.mubr.bf16.mxu0 0
        %1478 = vmatmul.mubr.bf16.gmra.mrb[0].mxu0 %v1440
        %v1479 = vpop.f32.mrb[0].mxu0
        %v1480 = vadd.f32 0.0, %v1479
        %v1481 = vpop.f32.mrb[0].mxu0
        %v1482 = vpop.f32.mrb[0].mxu0
        %v1483 = vpop.f32.mrb[0].mxu0
        %1484 = vdwg.mxu0
        %v1486 = vsel %vm1392, %v1386, 0
        %v1489 = vsel %vm1392, %v1390, 0
        %1491 = vmatprep.subr.bf16.mxu0 0
        %1492 = vmatpush1.bf16.xpose.msra.mxu0 %v1489
        %1493 = vmatprep.subr.bf16.mxu0 0
        %1494 = vmatpush1.bf16.xpose.msra.mxu0 0
        %1495 = vmatprep.subr.bf16.mxu0 0
        %1496 = vmatpush1.bf16.xpose.msra.mxu0 0
        %1497 = vmatprep.subr.bf16.mxu0 0
        %1498 = vmatpush1.bf16.xpose.msra.mxu0 0
        %1499 = vmatprep.subr.bf16.mxu0 0
        %1500 = vmatpush1.bf16.xpose.msra.mxu0 0
        %1501 = vmatprep.subr.bf16.mxu0 0
        %1502 = vmatpush1.bf16.xpose.msra.mxu0 0
        %1503 = vmatprep.subr.bf16.mxu0 0
        %1504 = vmatpush1.bf16.xpose.msra.mxu0 0
        %1505 = vmatprep.subr.bf16.mxu0 0
        %1506 = vmatpush1.bf16.xpose.msra.mxu0 0
        %1507 = vmatprep.subr.bf16.mxu0 0
        %1508 = vmatpush1.bf16.xpose.msra.mxu0 0
        %1509 = vmatprep.subr.bf16.mxu0 0
        %1510 = vmatpush1.bf16.xpose.msra.mxu0 0
        %1511 = vmatprep.subr.bf16.mxu0 0
        %1512 = vmatpush1.bf16.xpose.msra.mxu0 0
        %1513 = vmatprep.subr.bf16.mxu0 0
        %1514 = vmatpush1.bf16.xpose.msra.mxu0 0
        %1515 = vmatprep.subr.bf16.mxu0 0
        %1516 = vmatpush1.bf16.xpose.msra.mxu0 0
        %1517 = vmatprep.subr.bf16.mxu0 0
        %1518 = vmatpush1.bf16.xpose.msra.mxu0 0
        %1519 = vmatprep.subr.bf16.mxu0 0
        %1520 = vmatpush1.bf16.xpose.msra.mxu0 0
        %1521 = vmatprep.subr.bf16.mxu0 0
        %1522 = vmatpush1.bf16.xpose.msra.mxu0 0
        %1523 = vmatprep.mubr.bf16.mxu0 0
        %1524 = vmatmul.mubr.bf16.gmra.mrb[0].mxu0 %v1486
        %v1525 = vpop.f32.mrb[0].mxu0
        %v1526 = vadd.f32 0.0, %v1525
        %v1527 = vpop.f32.mrb[0].mxu0
        %v1528 = vpop.f32.mrb[0].mxu0
        %v1529 = vpop.f32.mrb[0].mxu0
        %1530 = vdwg.mxu0
        %v1532 = vsel %vm1392, %v1387, 0
        %v1535 = vsel %vm1392, %v1391, 0
        %1537 = vmatprep.subr.bf16.mxu0 0
        %1538 = vmatpush1.bf16.xpose.msra.mxu0 %v1535
        %1539 = vmatprep.subr.bf16.mxu0 0
        %1540 = vmatpush1.bf16.xpose.msra.mxu0 0
        %1541 = vmatprep.subr.bf16.mxu0 0
        %1542 = vmatpush1.bf16.xpose.msra.mxu0 0
        %1543 = vmatprep.subr.bf16.mxu0 0
        %1544 = vmatpush1.bf16.xpose.msra.mxu0 0
        %1545 = vmatprep.subr.bf16.mxu0 0
        %1546 = vmatpush1.bf16.xpose.msra.mxu0 0
        %1547 = vmatprep.subr.bf16.mxu0 0
        %1548 = vmatpush1.bf16.xpose.msra.mxu0 0
        %1549 = vmatprep.subr.bf16.mxu0 0
        %1550 = vmatpush1.bf16.xpose.msra.mxu0 0
        %1551 = vmatprep.subr.bf16.mxu0 0
        %1552 = vmatpush1.bf16.xpose.msra.mxu0 0
        %1553 = vmatprep.subr.bf16.mxu0 0
        %1554 = vmatpush1.bf16.xpose.msra.mxu0 0
        %1555 = vmatprep.subr.bf16.mxu0 0
        %1556 = vmatpush1.bf16.xpose.msra.mxu0 0
        %1557 = vmatprep.subr.bf16.mxu0 0
        %1558 = vmatpush1.bf16.xpose.msra.mxu0 0
        %1559 = vmatprep.subr.bf16.mxu0 0
        %1560 = vmatpush1.bf16.xpose.msra.mxu0 0
        %1561 = vmatprep.subr.bf16.mxu0 0
        %1562 = vmatpush1.bf16.xpose.msra.mxu0 0
        %1563 = vmatprep.subr.bf16.mxu0 0
        %1564 = vmatpush1.bf16.xpose.msra.mxu0 0
        %1565 = vmatprep.subr.bf16.mxu0 0
        %1566 = vmatpush1.bf16.xpose.msra.mxu0 0
        %1567 = vmatprep.subr.bf16.mxu0 0
        %1568 = vmatpush1.bf16.xpose.msra.mxu0 0
        %1569 = vmatprep.mubr.bf16.mxu0 0
        %1570 = vmatmul.mubr.bf16.gmra.mrb[0].mxu0 %v1532
        %v1571 = vpop.f32.mrb[0].mxu0
        %v1572 = vadd.f32 0.0, %v1571
        %v1573 = vpop.f32.mrb[0].mxu0
        %v1574 = vpop.f32.mrb[0].mxu0
        %v1575 = vpop.f32.mrb[0].mxu0
        %1576 = vdwg.mxu0
        %v1577 = vsel %vm1392, %v1434, -inf
        %1578 = vmax.xlane.f32.xlu0 %v1577
        %v1579 = vpop.xlane.xlu0 %1578
        %v1580 = vsel %vm1392, %v1480, -inf
        %1581 = vmax.xlane.f32.xlu0 %v1580
        %v1582 = vpop.xlane.xlu0 %1581
        %v1583 = vsel %vm1392, %v1526, -inf
        %1584 = vmax.xlane.f32.xlu0 %v1583
        %v1585 = vpop.xlane.xlu0 %1584
        %v1586 = vsel %vm1392, %v1572, -inf
        %1587 = vmax.xlane.f32.xlu0 %v1586
        %v1588 = vpop.xlane.xlu0 %1587
        %v1589 = vsub.f32 %v1434, %v1579
        %v1590 = vsub.f32 %v1480, %v1582
        %v1591 = vsub.f32 %v1526, %v1585
        %v1592 = vsub.f32 %v1572, %v1588
        %v1593 = vmul.f32 %v1589, 1.442695
        %v1594 = vpow.pop %v1593
        %v1595 = vmul.f32 %v1590, 1.442695
        %v1596 = vpow.pop %v1595
        %v1597 = vmul.f32 %v1591, 1.442695
        %v1598 = vpow.pop %v1597
        %v1599 = vmul.f32 %v1592, 1.442695
        %v1600 = vpow.pop %v1599
        %v1601 = vsel %vm1392, %v1594, 0.0
        %1602 = vadd.xlane.f32.xlu0 %v1601
        %v1603 = vpop.xlane.xlu0 %1602
        %v1604 = vsel %vm1392, %v1596, 0.0
        %1605 = vadd.xlane.f32.xlu0 %v1604
        %v1606 = vpop.xlane.xlu0 %1605
        %v1607 = vsel %vm1392, %v1598, 0.0
        %1608 = vadd.xlane.f32.xlu0 %v1607
        %v1609 = vpop.xlane.xlu0 %1608
        %v1610 = vsel %vm1392, %v1600, 0.0
        %1611 = vadd.xlane.f32.xlu0 %v1610
        %v1612 = vpop.xlane.xlu0 %1611
        %v1613 = vrcp.pop %v1603
        %v1614 = vrcp.pop %v1606
        %v1615 = vrcp.pop %v1609
        %v1616 = vrcp.pop %v1612
        %v1617 = vmul.f32 %v1594, %v1613
        %v1618 = vmul.f32 %v1596, %v1614
        %v1619 = vmul.f32 %v1598, %v1615
        %v1620 = vmul.f32 %v1600, %v1616
        %v1621 = vpack.c.bf16 %v1617, %v1617
        %v1622 = vpack.c.bf16 %v1618, %v1618
        %v1623 = vpack.c.bf16 %v1619, %v1619
        %v1624 = vpack.c.bf16 %v1620, %v1620
        %v1625 = vld [vmem:[#allocation3] sm:$0xf]
        %v1626 = vld [vmem:[#allocation3 + $0x4] sm:$0xf]
        %v1627 = vld [vmem:[#allocation3 + $0x8] sm:$0xf]
        %v1628 = vld [vmem:[#allocation3 + $0xc] sm:$0xf]
        %v1630 = vsel %vm1392, %v1621, 0
        %vm1632 = vcmask 1043456
        %v1634 = vsel %vm1632, %v1625, 0
        %1636 = vmatprep.subr.bf16.mxu0 0
        %1637 = vmatpush1.bf16.msra.mxu0 %v1634
        %1638 = vmatprep.subr.bf16.mxu0 0
        %1639 = vmatpush1.bf16.msra.mxu0 0
        %1640 = vmatprep.subr.bf16.mxu0 0
        %1641 = vmatpush1.bf16.msra.mxu0 0
        %1642 = vmatprep.subr.bf16.mxu0 0
        %1643 = vmatpush1.bf16.msra.mxu0 0
        %1644 = vmatprep.subr.bf16.mxu0 0
        %1645 = vmatpush1.bf16.msra.mxu0 0
        %1646 = vmatprep.subr.bf16.mxu0 0
        %1647 = vmatpush1.bf16.msra.mxu0 0
        %1648 = vmatprep.subr.bf16.mxu0 0
        %1649 = vmatpush1.bf16.msra.mxu0 0
        %1650 = vmatprep.subr.bf16.mxu0 0
        %1651 = vmatpush1.bf16.msra.mxu0 0
        %1652 = vmatprep.subr.bf16.mxu0 0
        %1653 = vmatpush1.bf16.msra.mxu0 0
        %1654 = vmatprep.subr.bf16.mxu0 0
        %1655 = vmatpush1.bf16.msra.mxu0 0
        %1656 = vmatprep.subr.bf16.mxu0 0
        %1657 = vmatpush1.bf16.msra.mxu0 0
        %1658 = vmatprep.subr.bf16.mxu0 0
        %1659 = vmatpush1.bf16.msra.mxu0 0
        %1660 = vmatprep.subr.bf16.mxu0 0
        %1661 = vmatpush1.bf16.msra.mxu0 0
        %1662 = vmatprep.subr.bf16.mxu0 0
        %1663 = vmatpush1.bf16.msra.mxu0 0
        %1664 = vmatprep.subr.bf16.mxu0 0
        %1665 = vmatpush1.bf16.msra.mxu0 0
        %1666 = vmatprep.subr.bf16.mxu0 0
        %1667 = vmatpush1.bf16.msra.mxu0 0
        %1668 = vmatprep.mubr.bf16.mxu0 0
        %1669 = vmatmul.mubr.bf16.gmra.mrb[0].mxu0 %v1630
        %v1670 = vpop.f32.mrb[0].mxu0
        %v1671 = vadd.f32 0.0, %v1670
        %v1672 = vpop.f32.mrb[0].mxu0
        %v1673 = vpop.f32.mrb[0].mxu0
        %v1674 = vpop.f32.mrb[0].mxu0
        %1675 = vdwg.mxu0
        %v1677 = vsel %vm1392, %v1622, 0
        %v1680 = vsel %vm1632, %v1626, 0
        %1682 = vmatprep.subr.bf16.mxu0 0
        %1683 = vmatpush1.bf16.msra.mxu0 %v1680
        %1684 = vmatprep.subr.bf16.mxu0 0
        %1685 = vmatpush1.bf16.msra.mxu0 0
        %1686 = vmatprep.subr.bf16.mxu0 0
        %1687 = vmatpush1.bf16.msra.mxu0 0
        %1688 = vmatprep.subr.bf16.mxu0 0
        %1689 = vmatpush1.bf16.msra.mxu0 0
        %1690 = vmatprep.subr.bf16.mxu0 0
        %1691 = vmatpush1.bf16.msra.mxu0 0
        %1692 = vmatprep.subr.bf16.mxu0 0
        %1693 = vmatpush1.bf16.msra.mxu0 0
        %1694 = vmatprep.subr.bf16.mxu0 0
        %1695 = vmatpush1.bf16.msra.mxu0 0
        %1696 = vmatprep.subr.bf16.mxu0 0
        %1697 = vmatpush1.bf16.msra.mxu0 0
        %1698 = vmatprep.subr.bf16.mxu0 0
        %1699 = vmatpush1.bf16.msra.mxu0 0
        %1700 = vmatprep.subr.bf16.mxu0 0
        %1701 = vmatpush1.bf16.msra.mxu0 0
        %1702 = vmatprep.subr.bf16.mxu0 0
        %1703 = vmatpush1.bf16.msra.mxu0 0
        %1704 = vmatprep.subr.bf16.mxu0 0
        %1705 = vmatpush1.bf16.msra.mxu0 0
        %1706 = vmatprep.subr.bf16.mxu0 0
        %1707 = vmatpush1.bf16.msra.mxu0 0
        %1708 = vmatprep.subr.bf16.mxu0 0
        %1709 = vmatpush1.bf16.msra.mxu0 0
        %1710 = vmatprep.subr.bf16.mxu0 0
        %1711 = vmatpush1.bf16.msra.mxu0 0
        %1712 = vmatprep.subr.bf16.mxu0 0
        %1713 = vmatpush1.bf16.msra.mxu0 0
        %1714 = vmatprep.mubr.bf16.mxu0 0
        %1715 = vmatmul.mubr.bf16.gmra.mrb[0].mxu0 %v1677
        %v1716 = vpop.f32.mrb[0].mxu0
        %v1717 = vadd.f32 0.0, %v1716
        %v1718 = vpop.f32.mrb[0].mxu0
        %v1719 = vpop.f32.mrb[0].mxu0
        %v1720 = vpop.f32.mrb[0].mxu0
        %1721 = vdwg.mxu0
        %v1723 = vsel %vm1392, %v1623, 0
        %v1726 = vsel %vm1632, %v1627, 0
        %1728 = vmatprep.subr.bf16.mxu0 0
        %1729 = vmatpush1.bf16.msra.mxu0 %v1726
        %1730 = vmatprep.subr.bf16.mxu0 0
        %1731 = vmatpush1.bf16.msra.mxu0 0
        %1732 = vmatprep.subr.bf16.mxu0 0
        %1733 = vmatpush1.bf16.msra.mxu0 0
        %1734 = vmatprep.subr.bf16.mxu0 0
        %1735 = vmatpush1.bf16.msra.mxu0 0
        %1736 = vmatprep.subr.bf16.mxu0 0
        %1737 = vmatpush1.bf16.msra.mxu0 0
        %1738 = vmatprep.subr.bf16.mxu0 0
        %1739 = vmatpush1.bf16.msra.mxu0 0
        %1740 = vmatprep.subr.bf16.mxu0 0
        %1741 = vmatpush1.bf16.msra.mxu0 0
        %1742 = vmatprep.subr.bf16.mxu0 0
        %1743 = vmatpush1.bf16.msra.mxu0 0
        %1744 = vmatprep.subr.bf16.mxu0 0
        %1745 = vmatpush1.bf16.msra.mxu0 0
        %1746 = vmatprep.subr.bf16.mxu0 0
        %1747 = vmatpush1.bf16.msra.mxu0 0
        %1748 = vmatprep.subr.bf16.mxu0 0
        %1749 = vmatpush1.bf16.msra.mxu0 0
        %1750 = vmatprep.subr.bf16.mxu0 0
        %1751 = vmatpush1.bf16.msra.mxu0 0
        %1752 = vmatprep.subr.bf16.mxu0 0
        %1753 = vmatpush1.bf16.msra.mxu0 0
        %1754 = vmatprep.subr.bf16.mxu0 0
        %1755 = vmatpush1.bf16.msra.mxu0 0
        %1756 = vmatprep.subr.bf16.mxu0 0
        %1757 = vmatpush1.bf16.msra.mxu0 0
        %1758 = vmatprep.subr.bf16.mxu0 0
        %1759 = vmatpush1.bf16.msra.mxu0 0
        %1760 = vmatprep.mubr.bf16.mxu0 0
        %1761 = vmatmul.mubr.bf16.gmra.mrb[0].mxu0 %v1723
        %v1762 = vpop.f32.mrb[0].mxu0
        %v1763 = vadd.f32 0.0, %v1762
        %v1764 = vpop.f32.mrb[0].mxu0
        %v1765 = vpop.f32.mrb[0].mxu0
        %v1766 = vpop.f32.mrb[0].mxu0
        %1767 = vdwg.mxu0
        %v1769 = vsel %vm1392, %v1624, 0
        %v1772 = vsel %vm1632, %v1628, 0
        %1774 = vmatprep.subr.bf16.mxu0 0
        %1775 = vmatpush1.bf16.msra.mxu0 %v1772
        %1776 = vmatprep.subr.bf16.mxu0 0
        %1777 = vmatpush1.bf16.msra.mxu0 0
        %1778 = vmatprep.subr.bf16.mxu0 0
        %1779 = vmatpush1.bf16.msra.mxu0 0
        %1780 = vmatprep.subr.bf16.mxu0 0
        %1781 = vmatpush1.bf16.msra.mxu0 0
        %1782 = vmatprep.subr.bf16.mxu0 0
        %1783 = vmatpush1.bf16.msra.mxu0 0
        %1784 = vmatprep.subr.bf16.mxu0 0
        %1785 = vmatpush1.bf16.msra.mxu0 0
        %1786 = vmatprep.subr.bf16.mxu0 0
        %1787 = vmatpush1.bf16.msra.mxu0 0
        %1788 = vmatprep.subr.bf16.mxu0 0
        %1789 = vmatpush1.bf16.msra.mxu0 0
        %1790 = vmatprep.subr.bf16.mxu0 0
        %1791 = vmatpush1.bf16.msra.mxu0 0
        %1792 = vmatprep.subr.bf16.mxu0 0
        %1793 = vmatpush1.bf16.msra.mxu0 0
        %1794 = vmatprep.subr.bf16.mxu0 0
        %1795 = vmatpush1.bf16.msra.mxu0 0
        %1796 = vmatprep.subr.bf16.mxu0 0
        %1797 = vmatpush1.bf16.msra.mxu0 0
        %1798 = vmatprep.subr.bf16.mxu0 0
        %1799 = vmatpush1.bf16.msra.mxu0 0
        %1800 = vmatprep.subr.bf16.mxu0 0
        %1801 = vmatpush1.bf16.msra.mxu0 0
        %1802 = vmatprep.subr.bf16.mxu0 0
        %1803 = vmatpush1.bf16.msra.mxu0 0
        %1804 = vmatprep.subr.bf16.mxu0 0
        %1805 = vmatpush1.bf16.msra.mxu0 0
        %1806 = vmatprep.mubr.bf16.mxu0 0
        %1807 = vmatmul.mubr.bf16.gmra.mrb[0].mxu0 %v1769
        %v1808 = vpop.f32.mrb[0].mxu0
        %v1809 = vadd.f32 0.0, %v1808
        %v1810 = vpop.f32.mrb[0].mxu0
        %v1811 = vpop.f32.mrb[0].mxu0
        %v1812 = vpop.f32.mrb[0].mxu0
        %1813 = vdwg.mxu0
        %v1814 = vcombine.low %v1671, %v1763
        %v1815 = vcombine.high %v1671, %v1763
        %v1817 = vunpack.c.l.s4 1983009808
        %v1818 = vunpack.c.0.s8 %v1817
        %v1819 = vlaneseq
        %v1820 = vshrl.u32 %v1819, 7
        %v1821 = vsub.s32 %v1818, %v1820
        %v1822 = vrot.slane %v1814, %v1821
        %v1824 = vunpack.c.l.s4 1983009808
        %v1825 = vunpack.c.0.s8 %v1824
        %v1826 = vlaneseq
        %v1827 = vshrl.u32 %v1826, 7
        %v1828 = vsub.s32 %v1825, %v1827
        %v1829 = vrot.slane %v1815, %v1828
        %v1830 = vcombine.low %v1717, %v1809
        %v1831 = vcombine.high %v1717, %v1809
        %v1833 = vunpack.c.l.s4 1983009808
        %v1834 = vunpack.c.0.s8 %v1833
        %v1835 = vlaneseq
        %v1836 = vshrl.u32 %v1835, 7
        %v1837 = vsub.s32 %v1834, %v1836
        %v1838 = vrot.slane %v1830, %v1837
        %v1840 = vunpack.c.l.s4 1983009808
        %v1841 = vunpack.c.0.s8 %v1840
        %v1842 = vlaneseq
        %v1843 = vshrl.u32 %v1842, 7
        %v1844 = vsub.s32 %v1841, %v1843
        %v1845 = vrot.slane %v1831, %v1844
        %v1846 = vcombine.low %v1822, %v1838
        %v1847 = vcombine.high %v1822, %v1838
        %v1849 = vunpack.c.l.s4 1934713408
        %v1850 = vunpack.c.0.s8 %v1849
        %v1851 = vlaneseq
        %v1852 = vshrl.u32 %v1851, 7
        %v1853 = vsub.s32 %v1850, %v1852
        %v1854 = vrot.slane %v1846, %v1853
        %v1856 = vunpack.c.l.s4 1934713408
        %v1857 = vunpack.c.0.s8 %v1856
        %v1858 = vlaneseq
        %v1859 = vshrl.u32 %v1858, 7
        %v1860 = vsub.s32 %v1857, %v1859
        %v1861 = vrot.slane %v1847, %v1860
        %v1862 = vcombine.low %v1829, %v1845
        %v1863 = vcombine.high %v1829, %v1845
        %v1865 = vunpack.c.l.s4 1934713408
        %v1866 = vunpack.c.0.s8 %v1865
        %v1867 = vlaneseq
        %v1868 = vshrl.u32 %v1867, 7
        %v1869 = vsub.s32 %v1866, %v1868
        %v1870 = vrot.slane %v1862, %v1869
        %v1872 = vunpack.c.l.s4 1934713408
        %v1873 = vunpack.c.0.s8 %v1872
        %v1874 = vlaneseq
        %v1875 = vshrl.u32 %v1874, 7
        %v1876 = vsub.s32 %v1873, %v1875
        %v1877 = vrot.slane %v1863, %v1876
        %v1878 = vcombine.high %v1854, 0.0
        %v1879 = vcombine.high %v1861, 0.0
        %v1880 = vcombine.high %v1870, 0.0
        %v1881 = vcombine.high %v1877, 0.0
        %v1882 = vcombine.low %v1854, %v1861
        %v1884 = vunpack.c.l.s4 1983009808
        %v1885 = vunpack.c.0.s8 %v1884
        %v1886 = vlaneseq
        %v1887 = vshrl.u32 %v1886, 7
        %v1888 = vsub.s32 %v1885, %v1887
        %v1889 = vrot.slane %v1882, %v1888
        %v1890 = vcombine.low %v1878, %v1879
        %v1892 = vunpack.c.l.s4 1983009808
        %v1893 = vunpack.c.0.s8 %v1892
        %v1894 = vlaneseq
        %v1895 = vshrl.u32 %v1894, 7
        %v1896 = vsub.s32 %v1893, %v1895
        %v1897 = vrot.slane %v1890, %v1896
        %v1898 = vcombine.low %v1870, %v1877
        %v1900 = vunpack.c.l.s4 1983009808
        %v1901 = vunpack.c.0.s8 %v1900
        %v1902 = vlaneseq
        %v1903 = vshrl.u32 %v1902, 7
        %v1904 = vsub.s32 %v1901, %v1903
        %v1905 = vrot.slane %v1898, %v1904
        %v1906 = vcombine.low %v1880, %v1881
        %v1908 = vunpack.c.l.s4 1983009808
        %v1909 = vunpack.c.0.s8 %v1908
        %v1910 = vlaneseq
        %v1911 = vshrl.u32 %v1910, 7
        %v1912 = vsub.s32 %v1909, %v1911
        %v1913 = vrot.slane %v1906, %v1912
        %v1914 = vcombine.low %v1889, %v1897
        %v1915 = vcombine.high %v1889, %v1897
        %v1917 = vunpack.c.l.s4 1934713408
        %v1918 = vunpack.c.0.s8 %v1917
        %v1919 = vlaneseq
        %v1920 = vshrl.u32 %v1919, 7
        %v1921 = vsub.s32 %v1918, %v1920
        %v1922 = vrot.slane %v1914, %v1921
        %v1924 = vunpack.c.l.s4 1934713408
        %v1925 = vunpack.c.0.s8 %v1924
        %v1926 = vlaneseq
        %v1927 = vshrl.u32 %v1926, 7
        %v1928 = vsub.s32 %v1925, %v1927
        %v1929 = vrot.slane %v1915, %v1928
        %v1930 = vcombine.low %v1905, %v1913
        %v1931 = vcombine.high %v1905, %v1913
        %v1933 = vunpack.c.l.s4 1934713408
        %v1934 = vunpack.c.0.s8 %v1933
        %v1935 = vlaneseq
        %v1936 = vshrl.u32 %v1935, 7
        %v1937 = vsub.s32 %v1934, %v1936
        %v1938 = vrot.slane %v1930, %v1937
        %v1940 = vunpack.c.l.s4 1934713408
        %v1941 = vunpack.c.0.s8 %v1940
        %v1942 = vlaneseq
        %v1943 = vshrl.u32 %v1942, 7
        %v1944 = vsub.s32 %v1941, %v1943
        %v1945 = vrot.slane %v1931, %v1944
        %v1946 = vcombine.low %v1922, %v1938
        %v1947 = vcombine.high %v1922, %v1938
        %v1948 = vcombine.low %v1929, %v1945
        %v1949 = vcombine.high %v1929, %v1945
        %1951 = vrot.lane.b32.xlu0 %v1947, 8
        %v1952 = vpop.permute.xlu0 %1951
        %1955 = vrot.lane.b32.xlu0 %v1948, 16
        %v1956 = vpop.permute.xlu0 %1955
        %1959 = vrot.lane.b32.xlu0 %v1949, 24
        %v1960 = vpop.permute.xlu0 %1959
        %v1962 = vsel %vm1392, %v1946, %v1952
        %vm1963 = vcmask 130048
        %v1964 = vsel %vm1963, %v1962, %v1956
        %vm1965 = vcmask 195584
        %v1966 = vsel %vm1965, %v1964, %v1960
        %v1967 = vpack.c.bf16 %v1966, %v1966
        %v1968 = vld [vmem:[%s9] sm:$0xf]
        %v1969 = vld [vmem:[%s9 + $0x4] sm:$0xf]
        %v1970 = vld [vmem:[%s9 + $0x8] sm:$0xf]
        %v1971 = vld [vmem:[%s9 + $0xc] sm:$0xf]
        %v1972 = vld [vmem:[#allocation13] sm:$0x1]
        %v1974 = vlaneseq
        %v1975 = vshrl.u32 %v1974, 7
        %v1976 = vsub.s32 0, %v1975
        %v1977 = vrot.slane %v1972, %v1976
        %v1983 = vunpack.c.l.b16 %v1968
        %v1984 = vunpack.c.l.b16 %v1969
        %v1985 = vunpack.c.l.b16 %v1970
        %v1986 = vunpack.c.l.b16 %v1971
        %v1987 = vpack.c.b16 %v1984, %v1983
        %v1988 = vpack.c.b16 %v1986, %v1985
        %v1992 = vsel %vm1142, %v1967, 0
        %1994 = vmatprep.subr.bf16.mxu0 0
        %1995 = vmatpush1.bf16.msra.mxu0 %v1987
        %1996 = vmatprep.subr.bf16.mxu0 0
        %1997 = vmatpush1.bf16.msra.mxu0 %v1988
        %1998 = vmatprep.subr.bf16.mxu0 0
        %1999 = vmatpush1.bf16.msra.mxu0 0
        %2000 = vmatprep.subr.bf16.mxu0 0
        %2001 = vmatpush1.bf16.msra.mxu0 0
        %2002 = vmatprep.subr.bf16.mxu0 0
        %2003 = vmatpush1.bf16.msra.mxu0 0
        %2004 = vmatprep.subr.bf16.mxu0 0
        %2005 = vmatpush1.bf16.msra.mxu0 0
        %2006 = vmatprep.subr.bf16.mxu0 0
        %2007 = vmatpush1.bf16.msra.mxu0 0
        %2008 = vmatprep.subr.bf16.mxu0 0
        %2009 = vmatpush1.bf16.msra.mxu0 0
        %2010 = vmatprep.subr.bf16.mxu0 0
        %2011 = vmatpush1.bf16.msra.mxu0 0
        %2012 = vmatprep.subr.bf16.mxu0 0
        %2013 = vmatpush1.bf16.msra.mxu0 0
        %2014 = vmatprep.subr.bf16.mxu0 0
        %2015 = vmatpush1.bf16.msra.mxu0 0
        %2016 = vmatprep.subr.bf16.mxu0 0
        %2017 = vmatpush1.bf16.msra.mxu0 0
        %2018 = vmatprep.subr.bf16.mxu0 0
        %2019 = vmatpush1.bf16.msra.mxu0 0
        %2020 = vmatprep.subr.bf16.mxu0 0
        %2021 = vmatpush1.bf16.msra.mxu0 0
        %2022 = vmatprep.subr.bf16.mxu0 0
        %2023 = vmatpush1.bf16.msra.mxu0 0
        %2024 = vmatprep.subr.bf16.mxu0 0
        %2025 = vmatpush1.bf16.msra.mxu0 0
        %2026 = vmatprep.mubr.bf16.mxu0 0
        %2027 = vmatmul.mubr.bf16.gmra.mrb[0].mxu0 %v1992
        %v2028 = vpop.f32.mrb[0].mxu0
        %v2029 = vadd.f32 %v1977, %v2028
        %v2030 = vpop.f32.mrb[0].mxu0
        %v2031 = vpop.f32.mrb[0].mxu0
        %v2032 = vpop.f32.mrb[0].mxu0
        %2033 = vdwg.mxu0
        %v2034 = vadd.f32 %v2029, %v1139
        %v2035 = vld [vmem:[#allocation15] sm:$0x1]
        %v2036 = vld [vmem:[#allocation16] sm:$0x1]
        %v2037 = vsel %vm1142, %v2034, 0.0
        %2038 = vadd.xlane.f32.xlu0 %v2037
        %v2039 = vpop.xlane.xlu0 %2038
        %v2040 = vmul.f32 %v2039, %v1146
        %v2041 = vsub.f32 %v2034, %v2040
        %v2042 = vmul.f32 %v2041, %v2041
        %v2043 = vsel %vm1142, %v2042, 0.0
        %2044 = vadd.xlane.f32.xlu0 %v2043
        %v2045 = vpop.xlane.xlu0 %2044
        %v2046 = vmul.f32 %v2045, %v1146
        %v2047 = vadd.f32 %v2046, 1e-05
        %v2048 = vrsqrt.pop %v2047
        %v2049 = vmul.f32 %v2041, %v2048
        %v2051 = vlaneseq
        %v2052 = vshrl.u32 %v2051, 7
        %v2053 = vsub.s32 0, %v2052
        %v2054 = vrot.slane %v2035, %v2053
        %v2056 = vmul.f32 %v2049, %v2054
        %v2058 = vlaneseq
        %v2059 = vshrl.u32 %v2058, 7
        %v2060 = vsub.s32 0, %v2059
        %v2061 = vrot.slane %v2036, %v2060
        %v2063 = vadd.f32 %v2056, %v2061
        %v2064 = vpack.c.bf16 %v2063, %v2063
        %v2065 = vld [vmem:[%s13] sm:$0xf]
        %v2066 = vld [vmem:[%s13 + $0x4] sm:$0xf]
        %v2067 = vld [vmem:[%s13 + $0x8] sm:$0xf]
        %v2068 = vld [vmem:[%s13 + $0xc] sm:$0xf]
        %v2069 = vld [vmem:[%s14] sm:$0x1]
        %v2071 = vlaneseq
        %v2072 = vshrl.u32 %v2071, 7
        %v2073 = vsub.s32 0, %v2072
        %v2074 = vrot.slane %v2069, %v2073
        %v2080 = vunpack.c.l.b16 %v2065
        %v2081 = vunpack.c.l.b16 %v2066
        %v2082 = vunpack.c.l.b16 %v2067
        %v2083 = vunpack.c.l.b16 %v2068
        %v2084 = vpack.c.b16 %v2081, %v2080
        %v2085 = vpack.c.b16 %v2083, %v2082
        %v2089 = vsel %vm1142, %v2064, 0
        %2091 = vmatprep.subr.bf16.mxu0 0
        %2092 = vmatpush1.bf16.msra.mxu0 %v2084
        %2093 = vmatprep.subr.bf16.mxu0 0
        %2094 = vmatpush1.bf16.msra.mxu0 %v2085
        %2095 = vmatprep.subr.bf16.mxu0 0
        %2096 = vmatpush1.bf16.msra.mxu0 0
        %2097 = vmatprep.subr.bf16.mxu0 0
        %2098 = vmatpush1.bf16.msra.mxu0 0
        %2099 = vmatprep.subr.bf16.mxu0 0
        %2100 = vmatpush1.bf16.msra.mxu0 0
        %2101 = vmatprep.subr.bf16.mxu0 0
        %2102 = vmatpush1.bf16.msra.mxu0 0
        %2103 = vmatprep.subr.bf16.mxu0 0
        %2104 = vmatpush1.bf16.msra.mxu0 0
        %2105 = vmatprep.subr.bf16.mxu0 0
        %2106 = vmatpush1.bf16.msra.mxu0 0
        %2107 = vmatprep.subr.bf16.mxu0 0
        %2108 = vmatpush1.bf16.msra.mxu0 0
        %2109 = vmatprep.subr.bf16.mxu0 0
        %2110 = vmatpush1.bf16.msra.mxu0 0
        %2111 = vmatprep.subr.bf16.mxu0 0
        %2112 = vmatpush1.bf16.msra.mxu0 0
        %2113 = vmatprep.subr.bf16.mxu0 0
        %2114 = vmatpush1.bf16.msra.mxu0 0
        %2115 = vmatprep.subr.bf16.mxu0 0
        %2116 = vmatpush1.bf16.msra.mxu0 0
        %2117 = vmatprep.subr.bf16.mxu0 0
        %2118 = vmatpush1.bf16.msra.mxu0 0
        %2119 = vmatprep.subr.bf16.mxu0 0
        %2120 = vmatpush1.bf16.msra.mxu0 0
        %2121 = vmatprep.subr.bf16.mxu0 0
        %2122 = vmatpush1.bf16.msra.mxu0 0
        %2123 = vmatprep.mubr.bf16.mxu0 0
        %2124 = vmatmul.mubr.bf16.gmra.mrb[0].mxu0 %v2089
        %v2125 = vpop.f32.mrb[0].mxu0
        %v2126 = vadd.f32 %v2074, %v2125
        %v2127 = vpop.f32.mrb[0].mxu0
        %v2128 = vpop.f32.mrb[0].mxu0
        %v2129 = vpop.f32.mrb[0].mxu0
        %2130 = vdwg.mxu0
        %v2131 = vmul.f32 %v2126, 0.5
        %v2132 = vmul.f32 %v2126, 0.044715
        %v2133 = vmul.f32 %v2132, %v2126
        %v2134 = vmul.f32 %v2133, %v2126
        %v2135 = vadd.f32 %v2126, %v2134
        %v2136 = vmul.f32 %v2135, 0.7978846
        %v2137 = vtanh.pop %v2136
        %v2138 = vadd.f32 %v2137, 1.0
        %v2139 = vmul.f32 %v2131, %v2138
        %v2140 = vpack.c.bf16 %v2139, %v2139
        %v2141 = vld [vmem:[%s15] sm:$0xf]
        %v2142 = vld [vmem:[%s15 + $0x4] sm:$0xf]
        %v2143 = vld [vmem:[%s15 + $0x8] sm:$0xf]
        %v2144 = vld [vmem:[%s15 + $0xc] sm:$0xf]
        %v2145 = vld [vmem:[%s15 + $0x10] sm:$0xf]
        %v2146 = vld [vmem:[%s15 + $0x14] sm:$0xf]
        %v2147 = vld [vmem:[%s15 + $0x18] sm:$0xf]
        %v2148 = vld [vmem:[%s15 + $0x1c] sm:$0xf]
        %v2149 = vld [vmem:[%s16] sm:$0x1]
        %v2151 = vlaneseq
        %v2152 = vshrl.u32 %v2151, 7
        %v2153 = vsub.s32 0, %v2152
        %v2154 = vrot.slane %v2149, %v2153
        %v2164 = vunpack.c.l.b16 %v2141
        %v2165 = vunpack.c.l.b16 %v2142
        %v2166 = vunpack.c.l.b16 %v2143
        %v2167 = vunpack.c.l.b16 %v2144
        %v2168 = vunpack.c.l.b16 %v2145
        %v2169 = vunpack.c.l.b16 %v2146
        %v2170 = vunpack.c.l.b16 %v2147
        %v2171 = vunpack.c.l.b16 %v2148
        %v2172 = vpack.c.b16 %v2165, %v2164
        %v2173 = vpack.c.b16 %v2167, %v2166
        %v2174 = vpack.c.b16 %v2169, %v2168
        %v2175 = vpack.c.b16 %v2171, %v2170
        %vm2180 = vcmask 523264
        %v2182 = vsel %vm2180, %v2140, 0
        %2184 = vmatprep.subr.bf16.mxu0 0
        %2185 = vmatpush1.bf16.msra.mxu0 %v2172
        %2186 = vmatprep.subr.bf16.mxu0 0
        %2187 = vmatpush1.bf16.msra.mxu0 %v2173
        %2188 = vmatprep.subr.bf16.mxu0 0
        %2189 = vmatpush1.bf16.msra.mxu0 %v2174
        %2190 = vmatprep.subr.bf16.mxu0 0
        %2191 = vmatpush1.bf16.msra.mxu0 %v2175
        %2192 = vmatprep.subr.bf16.mxu0 0
        %2193 = vmatpush1.bf16.msra.mxu0 0
        %2194 = vmatprep.subr.bf16.mxu0 0
        %2195 = vmatpush1.bf16.msra.mxu0 0
        %2196 = vmatprep.subr.bf16.mxu0 0
        %2197 = vmatpush1.bf16.msra.mxu0 0
        %2198 = vmatprep.subr.bf16.mxu0 0
        %2199 = vmatpush1.bf16.msra.mxu0 0
        %2200 = vmatprep.subr.bf16.mxu0 0
        %2201 = vmatpush1.bf16.msra.mxu0 0
        %2202 = vmatprep.subr.bf16.mxu0 0
        %2203 = vmatpush1.bf16.msra.mxu0 0
        %2204 = vmatprep.subr.bf16.mxu0 0
        %2205 = vmatpush1.bf16.msra.mxu0 0
        %2206 = vmatprep.subr.bf16.mxu0 0
        %2207 = vmatpush1.bf16.msra.mxu0 0
        %2208 = vmatprep.subr.bf16.mxu0 0
        %2209 = vmatpush1.bf16.msra.mxu0 0
        %2210 = vmatprep.subr.bf16.mxu0 0
        %2211 = vmatpush1.bf16.msra.mxu0 0
        %2212 = vmatprep.subr.bf16.mxu0 0
        %2213 = vmatpush1.bf16.msra.mxu0 0
        %2214 = vmatprep.subr.bf16.mxu0 0
        %2215 = vmatpush1.bf16.msra.mxu0 0
        %2216 = vmatprep.mubr.bf16.mxu0 0
        %2217 = vmatmul.mubr.bf16.gmra.mrb[0].mxu0 %v2182
        %v2218 = vpop.f32.mrb[0].mxu0
        %v2219 = vadd.f32 %v2154, %v2218
        %v2220 = vpop.f32.mrb[0].mxu0
        %v2221 = vpop.f32.mrb[0].mxu0
        %v2222 = vpop.f32.mrb[0].mxu0
        %2223 = vdwg.mxu0
        %v2224 = vadd.f32 %v2219, %v2034
        %2225 = vst.msk [vmem:[%s656] sm:$0xff] %vm1142, %v2224
        %s2226 = sand.u32 %s420, 1
        %s2227 = scalar_lea.sflag [#allocation6], %s2226
        %s2228 = sand.u32 %s420, 1
        %s2229 = smul.addr %s2228, 8
        %s2230 = scalar_lea.vmem [#allocation18], %s2229
        // Predicated region
        $region125: #{tpu_custom_call.1} parent=87 // pred_check
          %p2231 = pneg %p430
        $region126: #{tpu_custom_call.1} parent=87 // pred_check_branch
          %2233 = sbr.rel (%p2231) target = $region128
        $region127: #{tpu_custom_call.1} parent=87 // pred_region
          %s2235 = ssub.s32 128, 128
          %2236 = vsyncadd %s2227, %s2235
          %s2237 = sadd.s32 %s41, %s40
          %s2238 = smul.addr %s2237, 128
          %s2239 = scalar_lea.hbm %s17, %s2238
          %s2241 = sshll.u32 %s2230, 4
          %s2242 = int_to_ptr.vmem [resolvable:$true] %s2241
          %2244 = dma.vmem_to_hbm [thread:$0]  %s2242, 128, %s2239, %s2227
        $region128: #{tpu_custom_call.1} parent=87 // pred_fallthru
          _
      $region88: #{tpu_custom_call.1} parent=5 // pred_fallthru
        _
      %p2245 = scmp.le.s32.totalorder 2, %s31
      // Predicated region
      $region129: #{tpu_custom_call.1} parent=5 // pred_check
        %p2246 = pneg %p2245
      $region130: #{tpu_custom_call.1} parent=5 // pred_check_branch
        %2248 = sbr.rel (%p2246) target = $region132
      $region131: #{tpu_custom_call.1} parent=5 // pred_region
        %s2249 = ssub.s32 %s31, 2
        // Predicated region
        $region133: #{tpu_custom_call.1} parent=131 // pred_check
          %p2250 = pneg %p436
        $region134: #{tpu_custom_call.1} parent=131 // pred_check_branch
          %2252 = sbr.rel (%p2250) target = $region136
        $region135: #{tpu_custom_call.1} parent=131 // pred_region
          %s2253 = sand.u32 %s421, 1
          %s2254 = scalar_lea.sflag [#allocation6], %s2253
          %s2255 = sand.u32 %s421, 1
          %s2256 = smul.addr %s2255, 8
          %s2257 = scalar_lea.vmem [#allocation18], %s2256
          %2258 = dma.done %s2254, 128
        $region136: #{tpu_custom_call.1} parent=131 // pred_fallthru
          _
      $region132: #{tpu_custom_call.1} parent=5 // pred_fallthru
        _
    $region6: #{tpu_custom_call.1} parent=1 // loop_footer
      %s35 = sadd.s32 1, %s31
    $region7: #{tpu_custom_call.1} parent=1 // loop_footer_branch
      %30 = sbr.rel target = $region3
    $region8: #{tpu_custom_call.1} parent=1 // loop_exit
      _
    %2259 = vsyncpa [#allocation5], 1
    %s2260 = scalar_lea.sflag [#allocation5], 1
    %2261 = vsyncpa %s2260, 1
    %2262 = vsyncpa [#allocation8], 1
    %2263 = vsyncpa [#allocation11], 1
    %2264 = vsyncpa [#allocation14], 1
    %2265 = vsyncpa [#allocation17], 1
    %2266 = vsyncpa [#allocation6], 1
    %s2267 = scalar_lea.sflag [#allocation6], 1
    %2268 = vsyncpa %s2267, 1

</llo_original>
